<compile_context>
chip_gen: v6e
topology: v6e:2x2x1
jax: 0.10.0
libtpu: 0.0.40
codegen_flags: <defaults>
</compile_context>

<pallas_src>
import functools

import jax
import jax.numpy as jnp
from jax.experimental import pallas as pl
from jax.experimental.pallas import tpu as pltpu

LEAK = 0.01
BN_EPS = 1e-5
# Explicit scoped-VMEM limit: raises v5e's 16 MiB default, well under v7x's 64 MiB.
VMEM_LIMIT_BYTES = 32 * 1024 * 1024
# Per-tile VMEM (TILE=512, K<=896, bf16, double-buffered) is < 4 MiB -> fits every gen.
MAX_TILE_ROWS = 512


def _round_up(x, m):
    return (x + m - 1) // m * m


# -----------------------------------------------------------------------------
# Plain-JAX glue: strided-slice im2col producing a TRANSPOSED (K, rows) slab so
# that inside the kernels the long `rows` dimension maps to lanes.
# Only k*k strided slices (49 / 25 ops), not a Ho*Wo Python loop.
# TODO(synk): form the patches on-chip from an NHWC tile (sum of shifted
# matmuls / in-VMEM im2col with halo) instead of materializing the k*k-expanded
# slab in HBM, and fuse the two pallas_calls around the h1 round trip.
# -----------------------------------------------------------------------------
def im2col_T(x_cnhw, k, stride):
    """x_cnhw: (C, N, H, W) -> (k*k*C, N*Ho*Wo); row order (kh, kw, c), c fastest."""
    C, N, H, W = x_cnhw.shape
    Ho = (H - k) // stride + 1
    Wo = (W - k) // stride + 1
    slabs = []
    for kh in range(k):
        for kw in range(k):
            sl = jax.lax.slice(
                x_cnhw,
                (0, 0, kh, kw),
                (C, N, kh + (Ho - 1) * stride + 1, kw + (Wo - 1) * stride + 1),
                (1, 1, stride, stride))                       # (C, N, Ho, Wo)
            slabs.append(sl)
    p = jnp.stack(slabs, axis=0)                              # (k*k, C, N, Ho, Wo)
    return p.reshape(k * k * C, N * Ho * Wo), Ho, Wo


def _weight_T(w_oihw):
    """PyTorch (O, I, kh, kw) -> (O, kh*kw*I), column order (kh, kw, i), i fastest."""
    O = w_oihw.shape[0]
    return jnp.transpose(w_oihw, (0, 2, 3, 1)).reshape(O, -1)


# -----------------------------------------------------------------------------
# Kernel 1: conv1 (bf16 MXU matmul, f32 accumulate) + bias + leaky_relu,
# plus cross-tile BatchNorm sum / sum-of-squares accumulation.
# -----------------------------------------------------------------------------
def conv1_stats_kernel(p_ref, w_ref, b_ref, h_ref, sum_ref, ssq_ref, *, tile, n_valid):
    i = pl.program_id(0)

    # (32, Kp) @ (Kp, tile) -> (32, tile): rows are lane-dense.
    x = jnp.dot(w_ref[...], p_ref[...], preferred_element_type=jnp.float32)
    x = x + b_ref[...]                       # (32, 1) bias broadcast along lanes
    x = jnp.where(x > 0, x, LEAK * x)        # leaky_relu(0.01)
    h_ref[...] = x.astype(h_ref.dtype)

    # Masked per-channel statistics (padded rows excluded), accumulated in
    # resident (32, 1) output blocks across the "arbitrary" row-tile axis.
    col = jax.lax.broadcasted_iota(jnp.int32, x.shape, 1) + i * tile
    valid = (col < n_valid).astype(jnp.float32)
    xv = x * valid

    @pl.when(i == 0)
    def _():
        sum_ref[...] = jnp.zeros_like(sum_ref)
        ssq_ref[...] = jnp.zeros_like(ssq_ref)

    sum_ref[...] += jnp.sum(xv, axis=1, keepdims=True)
    ssq_ref[...] += jnp.sum(xv * xv, axis=1, keepdims=True)


# -----------------------------------------------------------------------------
# Kernel 2: conv2 (BN affine pre-folded into weight/bias) + leaky_relu,
# then encode 1x1 conv as VPU multiply + sublane reduce, tanh.
# -----------------------------------------------------------------------------
def conv2_encode_kernel(p_ref, w2_ref, b2_ref, w3_ref, b3_ref, o_ref):
    x = jnp.dot(w2_ref[...], p_ref[...], preferred_element_type=jnp.float32)  # (32, tile)
    x = x + b2_ref[...]
    x = jnp.where(x > 0, x, LEAK * x)
    # encode (32 -> 1): broadcast-multiply + channel reduce; output (1, tile) lane-dense.
    y = jnp.sum(x * w3_ref[...], axis=0, keepdims=True) + b3_ref[...]
    o_ref[...] = jnp.tanh(y)


# -----------------------------------------------------------------------------
# Encoder forward (NCHW in / NCHW out)
# -----------------------------------------------------------------------------
def encoder_forward(x_nchw, params, *, compute_dtype=jnp.bfloat16, max_tile=MAX_TILE_ROWS):
    f32 = jnp.float32
    N, _, _, _ = x_nchw.shape
    itm = jnp.dtype(compute_dtype).itemsize

    # ---------------------------------------------------------------- conv1 --
    p1t, H1, W1 = im2col_T(jnp.transpose(x_nchw, (1, 0, 2, 3)), k=7, stride=3)
    K1, rows1 = p1t.shape
    K1p = _round_up(K1, 128)                              # 147 -> 256
    tile1 = min(max_tile, _round_up(rows1, 128))
    rows1p = _round_up(rows1, tile1)
    p1t = jnp.pad(p1t, ((0, K1p - K1), (0, rows1p - rows1))).astype(compute_dtype)

    w1t = jnp.pad(_weight_T(params["w1"]), ((0, 0), (0, K1p - K1))).astype(compute_dtype)
    b1 = params["b1"].reshape(32, 1).astype(f32)

    grid1 = rows1p // tile1
    cost1 = pl.CostEstimate(
        flops=2 * 32 * K1p * rows1p,
        transcendentals=0,
        bytes_accessed=K1p * rows1p * itm + 32 * K1p * itm + 32 * rows1p * itm + 2 * 32 * 4)

    h1, s1, ss1 = pl.pallas_call(
        functools.partial(conv1_stats_kernel, tile=tile1, n_valid=rows1),
        out_shape=(jax.ShapeDtypeStruct((32, rows1p), compute_dtype),
                   jax.ShapeDtypeStruct((32, 1), f32),
                   jax.ShapeDtypeStruct((32, 1), f32)),
        grid=(grid1,),
        in_specs=[pl.BlockSpec((K1p, tile1), lambda i: (0, i)),
                  pl.BlockSpec((32, K1p), lambda i: (0, 0)),     # resident weights
                  pl.BlockSpec((32, 1), lambda i: (0, 0))],
        out_specs=(pl.BlockSpec((32, tile1), lambda i: (0, i)),
                   pl.BlockSpec((32, 1), lambda i: (0, 0)),      # resident accumulators
                   pl.BlockSpec((32, 1), lambda i: (0, 0))),
        compiler_params=pltpu.CompilerParams(
            dimension_semantics=("arbitrary",),                  # stats reduce across tiles
            vmem_limit_bytes=VMEM_LIMIT_BYTES),
        cost_estimate=cost1,
    )(p1t, w1t, b1)

    # BatchNorm finalize on 32 scalars (training-mode, biased variance).
    mean = s1[:, 0] / rows1
    var = jnp.maximum(ss1[:, 0] / rows1 - mean * mean, 0.0)
    scale = params["gamma"] * jax.lax.rsqrt(var + BN_EPS)
    shift = params["beta"] - mean * scale

    # ------------------------------------------------- conv2 + encode (fused) --
    h1 = h1[:, :rows1].reshape(32, N, H1, W1)                 # channel-major h1
    p2t, H2, W2 = im2col_T(h1, k=5, stride=2)
    K2, rows2 = p2t.shape
    K2p = _round_up(K2, 128)                                  # 800 -> 896
    tile2 = min(max_tile, _round_up(rows2, 128))
    rows2p = _round_up(rows2, tile2)
    p2t = jnp.pad(p2t, ((0, K2p - K2), (0, rows2p - rows2))).astype(compute_dtype)

    # Fold the BN per-channel affine exactly into conv2:
    #   W2 @ (scale*h + shift) + b2 == (W2*scale) @ h + (W2 @ shift + b2)
    w2t = _weight_T(params["w2"]).astype(f32)                 # (32, 800)
    kk2 = 5 * 5
    scale_cols = jnp.tile(scale, kk2)                         # (kh, kw, c) ordering, c fastest
    shift_cols = jnp.tile(shift, kk2)
    w2f = jnp.pad(w2t * scale_cols[None, :], ((0, 0), (0, K2p - K2))).astype(compute_dtype)
    b2f = (params["b2"] + w2t @ shift_cols).reshape(32, 1).astype(f32)
    w3 = params["w3"].reshape(1, 32).T.astype(f32)            # (32, 1)
    b3 = params["b3"].reshape(1, 1).astype(f32)

    grid2 = rows2p // tile2
    cost2 = pl.CostEstimate(
        flops=2 * 32 * K2p * rows2p + 4 * 32 * rows2p,
        transcendentals=rows2p,
        bytes_accessed=K2p * rows2p * itm + 32 * K2p * itm + rows2p * 4)

    out = pl.pallas_call(
        conv2_encode_kernel,
        out_shape=jax.ShapeDtypeStruct((1, rows2p), f32),
        grid=(grid2,),
        in_specs=[pl.BlockSpec((K2p, tile2), lambda i: (0, i)),
                  pl.BlockSpec((32, K2p), lambda i: (0, 0)),
                  pl.BlockSpec((32, 1), lambda i: (0, 0)),
                  pl.BlockSpec((32, 1), lambda i: (0, 0)),
                  pl.BlockSpec((1, 1), lambda i: (0, 0))],
        out_specs=pl.BlockSpec((1, tile2), lambda i: (0, i)),
        compiler_params=pltpu.CompilerParams(
            dimension_semantics=("parallel",),                 # independent row tiles (2 TCs on v7x)
            vmem_limit_bytes=VMEM_LIMIT_BYTES),
        cost_estimate=cost2,
    )(p2t, w2f, b2f, w3, b3)

    out = out[:, :rows2].reshape(1, N, H2, W2)
    return jnp.transpose(out, (1, 0, 2, 3))                    # NCHW


# -----------------------------------------------------------------------------
# Pure-JAX f32 reference (for correctness verification)
# -----------------------------------------------------------------------------
def encoder_reference(x, params):
    def conv(x, w, b, stride):
        y = jax.lax.conv_general_dilated(
            x, w, (stride, stride), "VALID",
            dimension_numbers=("NCHW", "OIHW", "NCHW"))
        return y + b[None, :, None, None]

    def lrelu(v):
        return jnp.where(v > 0, v, LEAK * v)

    h = lrelu(conv(x, params["w1"], params["b1"], 3))
    mean = jnp.mean(h, axis=(0, 2, 3), keepdims=True)
    var = jnp.mean((h - mean) ** 2, axis=(0, 2, 3), keepdims=True)
    h = (h - mean) * jax.lax.rsqrt(var + BN_EPS)
    h = h * params["gamma"][None, :, None, None] + params["beta"][None, :, None, None]
    h = lrelu(conv(h, params["w2"], params["b2"], 2))
    return jnp.tanh(conv(h, params["w3"], params["b3"], 1))


# -----------------------------------------------------------------------------
# Main
# -----------------------------------------------------------------------------
if __name__ == "__main__":
    key = jax.random.PRNGKey(0)
    k1, k2, k3, k4, k5, k6, kx = jax.random.split(key, 7)

    params = {
        "w1": 0.05 * jax.random.normal(k1, (32, 3, 7, 7), jnp.float32),
        "b1": 0.05 * jax.random.normal(k2, (32,), jnp.float32),
        "gamma": jnp.ones((32,), jnp.float32),     # BatchNorm2d default init
        "beta": jnp.zeros((32,), jnp.float32),
        "w2": 0.05 * jax.random.normal(k3, (32, 32, 5, 5), jnp.float32),
        "b2": 0.05 * jax.random.normal(k4, (32,), jnp.float32),
        "w3": 0.05 * jax.random.normal(k5, (1, 32, 1, 1), jnp.float32),
        "b3": 0.05 * jax.random.normal(k6, (1,), jnp.float32),
    }

    # N=2, C=3, H=W=64: conv1 -> 20x20, conv2 -> 8x8, encode -> (2, 1, 8, 8).
    # rows1 = 2*20*20 = 800 -> two 512-row tiles, exercising the cross-tile BN reduction.
    x = jax.random.normal(kx, (2, 3, 64, 64), jnp.float32)

    fwd = jax.jit(encoder_forward)
    out = jax.block_until_ready(fwd(x, params))

    ref = jax.block_until_ready(encoder_reference(x, params))
    assert out.shape == (2, 1, 8, 8), out.shape
    err = float(jnp.max(jnp.abs(out.astype(jnp.float32) - ref)))
    # bf16 MXU operands with f32 accumulation -> bf16-level tolerance vs f32 reference.
    assert err < 5e-2, err

    print("KERNEL_OK")
</pallas_src>

<mosaic_0001>
module attributes {stable_mosaic.version = 11 : i64} {
  func.func @conv1_stats_kernel(%arg0: i32, %arg1: memref<256x512xbf16, #tpu.memory_space<vmem>>, %arg2: memref<32x256xbf16, #tpu.memory_space<vmem>>, %arg3: memref<32x1xf32, #tpu.memory_space<vmem>>, %arg4: memref<32x512xbf16, #tpu.memory_space<vmem>>, %arg5: memref<32x1xf32, #tpu.memory_space<vmem>>, %arg6: memref<32x1xf32, #tpu.memory_space<vmem>>) attributes {dimension_semantics = [#tpu.dimension_semantics<arbitrary>], iteration_bounds = array<i64: 2>, scalar_prefetch = 0 : i64, scratch_operands = 0 : i64, tpu.core_type = #tpu.core_type<tc>, window_params = [{transform_indices = @transform_0, window_bounds = array<i64: 256, 512>}, {pipeline_mode = #tpu.pipeline_mode<synchronous>, transform_indices = @transform_1, window_bounds = array<i64: 32, 256>}, {pipeline_mode = #tpu.pipeline_mode<synchronous>, transform_indices = @transform_2, window_bounds = array<i64: 32, 1>}, {transform_indices = @transform_3, window_bounds = array<i64: 32, 512>}, {pipeline_mode = #tpu.pipeline_mode<synchronous>, transform_indices = @transform_4, window_bounds = array<i64: 32, 1>}, {pipeline_mode = #tpu.pipeline_mode<synchronous>, transform_indices = @transform_5, window_bounds = array<i64: 32, 1>}]} {
    %c0 = arith.constant 0 : index
    %c0_0 = arith.constant 0 : index
    %0 = vector.load %arg2[%c0, %c0_0] : memref<32x256xbf16, #tpu.memory_space<vmem>>, vector<32x256xbf16>
    %c0_1 = arith.constant 0 : index
    %c0_2 = arith.constant 0 : index
    %1 = vector.load %arg1[%c0_1, %c0_2] : memref<256x512xbf16, #tpu.memory_space<vmem>>, vector<256x512xbf16>
    %cst = arith.constant dense<0.000000e+00> : vector<32x512xf32>
    %2 = tpu.matmul %0, %1, %cst {dimension_numbers = #tpu.dot_dimension_numbers<[1], [0], [0], [1], [0, 0, 1, 1], [], []>} : vector<32x256xbf16>, vector<256x512xbf16>, vector<32x512xf32> -> vector<32x512xf32>
    %c0_3 = arith.constant 0 : index
    %c0_4 = arith.constant 0 : index
    %3 = vector.load %arg3[%c0_3, %c0_4] : memref<32x1xf32, #tpu.memory_space<vmem>>, vector<32x1xf32>
    %4 = vector.broadcast %3 : vector<32x1xf32> to vector<32x512xf32>
    %5 = arith.addf %2, %4 : vector<32x512xf32>
    %cst_5 = arith.constant 0.000000e+00 : f32
    %6 = vector.broadcast %cst_5 : f32 to vector<32x512xf32>
    %7 = arith.cmpf ogt, %5, %6 : vector<32x512xf32>
    %cst_6 = arith.constant 0.00999999977 : f32
    %8 = vector.broadcast %cst_6 : f32 to vector<32x512xf32>
    %9 = arith.mulf %8, %5 : vector<32x512xf32>
    %10 = arith.select %7, %5, %9 : vector<32x512xi1>, vector<32x512xf32>
    %11 = arith.truncf %10 : vector<32x512xf32> to vector<32x512xbf16>
    %c0_7 = arith.constant 0 : index
    %c0_8 = arith.constant 0 : index
    %12 = vector.load %arg4[%c0_7, %c0_8] : memref<32x512xbf16, #tpu.memory_space<vmem>>, vector<32x512xbf16>
    tpu.vector_store %arg4[%c0_7, %c0_8], %11 {strides = array<i32>} : memref<32x512xbf16, #tpu.memory_space<vmem>>, vector<32x512xbf16>,
    %13 = tpu.iota {dimensions = array<i32: 1>} : vector<32x512xi32>
    %c512_i32 = arith.constant 512 : i32
    %14 = arith.muli %arg0, %c512_i32 : i32
    %15 = vector.broadcast %14 : i32 to vector<32x512xi32>
    %16 = arith.addi %13, %15 : vector<32x512xi32>
    %c800_i32 = arith.constant 800 : i32
    %17 = vector.broadcast %c800_i32 : i32 to vector<32x512xi32>
    %18 = arith.cmpi slt, %16, %17 : vector<32x512xi32>
    %19 = arith.extui %18 : vector<32x512xi1> to vector<32x512xi32>
    %20 = arith.sitofp %19 : vector<32x512xi32> to vector<32x512xf32>
    %21 = arith.mulf %10, %20 : vector<32x512xf32>
    %c0_i32 = arith.constant 0 : i32
    %22 = arith.cmpi eq, %arg0, %c0_i32 : i32
    %23 = arith.extui %22 : i1 to i32
    %c0_i32_9 = arith.constant 0 : i32
    %24 = arith.cmpi ne, %23, %c0_i32_9 : i32
    scf.if %24 {
      %cst_20 = arith.constant 0.000000e+00 : f32
      %36 = vector.broadcast %cst_20 : f32 to vector<32x1xf32>
      %c0_21 = arith.constant 0 : index
      %c0_22 = arith.constant 0 : index
      %37 = vector.load %arg5[%c0_21, %c0_22] : memref<32x1xf32, #tpu.memory_space<vmem>>, vector<32x1xf32>
      tpu.vector_store %arg5[%c0_21, %c0_22], %36 {strides = array<i32>} : memref<32x1xf32, #tpu.memory_space<vmem>>, vector<32x1xf32>,
      %cst_23 = arith.constant 0.000000e+00 : f32
      %38 = vector.broadcast %cst_23 : f32 to vector<32x1xf32>
      %c0_24 = arith.constant 0 : index
      %c0_25 = arith.constant 0 : index
      %39 = vector.load %arg6[%c0_24, %c0_25] : memref<32x1xf32, #tpu.memory_space<vmem>>, vector<32x1xf32>
      tpu.vector_store %arg6[%c0_24, %c0_25], %38 {strides = array<i32>} : memref<32x1xf32, #tpu.memory_space<vmem>>, vector<32x1xf32>,
    } else {
    }
    %c0_10 = arith.constant 0 : index
    %c0_11 = arith.constant 0 : index
    %25 = vector.load %arg5[%c0_10, %c0_11] : memref<32x1xf32, #tpu.memory_space<vmem>>, vector<32x1xf32>
    %cst_12 = arith.constant dense<0.000000e+00> : vector<32xf32>
    %26 = vector.multi_reduction <add>, %21, %cst_12 [1] : vector<32x512xf32> to vector<32xf32>
    %27 = vector.shape_cast %26 : vector<32xf32> to vector<32x1xf32>
    %28 = arith.addf %25, %27 : vector<32x1xf32>
    %c0_13 = arith.constant 0 : index
    %c0_14 = arith.constant 0 : index
    %29 = vector.load %arg5[%c0_13, %c0_14] : memref<32x1xf32, #tpu.memory_space<vmem>>, vector<32x1xf32>
    tpu.vector_store %arg5[%c0_13, %c0_14], %28 {strides = array<i32>} : memref<32x1xf32, #tpu.memory_space<vmem>>, vector<32x1xf32>,
    %c0_15 = arith.constant 0 : index
    %c0_16 = arith.constant 0 : index
    %30 = vector.load %arg6[%c0_15, %c0_16] : memref<32x1xf32, #tpu.memory_space<vmem>>, vector<32x1xf32>
    %31 = arith.mulf %21, %21 : vector<32x512xf32>
    %cst_17 = arith.constant dense<0.000000e+00> : vector<32xf32>
    %32 = vector.multi_reduction <add>, %31, %cst_17 [1] : vector<32x512xf32> to vector<32xf32>
    %33 = vector.shape_cast %32 : vector<32xf32> to vector<32x1xf32>
    %34 = arith.addf %30, %33 : vector<32x1xf32>
    %c0_18 = arith.constant 0 : index
    %c0_19 = arith.constant 0 : index
    %35 = vector.load %arg6[%c0_18, %c0_19] : memref<32x1xf32, #tpu.memory_space<vmem>>, vector<32x1xf32>
    tpu.vector_store %arg6[%c0_18, %c0_19], %34 {strides = array<i32>} : memref<32x1xf32, #tpu.memory_space<vmem>>, vector<32x1xf32>,
    return
  }
  func.func @transform_0(%arg0: i32) -> (i32, i32) {
    %c0_i32 = arith.constant 0 : i32
    %c0_i32_0 = arith.constant 0 : i32
    return %c0_i32, %arg0 : i32, i32
  }
  func.func @transform_1(%arg0: i32) -> (i32, i32) {
    %c0_i32 = arith.constant 0 : i32
    %c0_i32_0 = arith.constant 0 : i32
    %c0_i32_1 = arith.constant 0 : i32
    return %c0_i32, %c0_i32_0 : i32, i32
  }
  func.func @transform_2(%arg0: i32) -> (i32, i32) {
    %c0_i32 = arith.constant 0 : i32
    %c0_i32_0 = arith.constant 0 : i32
    %c0_i32_1 = arith.constant 0 : i32
    return %c0_i32, %c0_i32_0 : i32, i32
  }
  func.func @transform_3(%arg0: i32) -> (i32, i32) {
    %c0_i32 = arith.constant 0 : i32
    %c0_i32_0 = arith.constant 0 : i32
    return %c0_i32, %arg0 : i32, i32
  }
  func.func @transform_4(%arg0: i32) -> (i32, i32) {
    %c0_i32 = arith.constant 0 : i32
    %c0_i32_0 = arith.constant 0 : i32
    %c0_i32_1 = arith.constant 0 : i32
    return %c0_i32, %c0_i32_0 : i32, i32
  }
  func.func @transform_5(%arg0: i32) -> (i32, i32) {
    %c0_i32 = arith.constant 0 : i32
    %c0_i32_0 = arith.constant 0 : i32
    %c0_i32_1 = arith.constant 0 : i32
    return %c0_i32, %c0_i32_0 : i32, i32
  }
}

module attributes {stable_mosaic.version = 11 : i64} {
  func.func @conv2_encode_kernel(%arg0: i32, %arg1: memref<896x128xbf16, #tpu.memory_space<vmem>>, %arg2: memref<32x896xbf16, #tpu.memory_space<vmem>>, %arg3: memref<32x1xf32, #tpu.memory_space<vmem>>, %arg4: memref<32x1xf32, #tpu.memory_space<vmem>>, %arg5: memref<1x1xf32, #tpu.memory_space<vmem>>, %arg6: memref<1x128xf32, #tpu.memory_space<vmem>>) attributes {dimension_semantics = [#tpu.dimension_semantics<parallel>], iteration_bounds = array<i64: 1>, scalar_prefetch = 0 : i64, scratch_operands = 0 : i64, tpu.core_type = #tpu.core_type<tc>, window_params = [{transform_indices = @transform_0, window_bounds = array<i64: 896, 128>}, {pipeline_mode = #tpu.pipeline_mode<synchronous>, transform_indices = @transform_1, window_bounds = array<i64: 32, 896>}, {pipeline_mode = #tpu.pipeline_mode<synchronous>, transform_indices = @transform_2, window_bounds = array<i64: 32, 1>}, {pipeline_mode = #tpu.pipeline_mode<synchronous>, transform_indices = @transform_3, window_bounds = array<i64: 32, 1>}, {pipeline_mode = #tpu.pipeline_mode<synchronous>, transform_indices = @transform_4, window_bounds = array<i64: 1, 1>}, {transform_indices = @transform_5, window_bounds = array<i64: 1, 128>}]} {
    %c0 = arith.constant 0 : index
    %c0_0 = arith.constant 0 : index
    %0 = vector.load %arg2[%c0, %c0_0] : memref<32x896xbf16, #tpu.memory_space<vmem>>, vector<32x896xbf16>
    %c0_1 = arith.constant 0 : index
    %c0_2 = arith.constant 0 : index
    %1 = vector.load %arg1[%c0_1, %c0_2] : memref<896x128xbf16, #tpu.memory_space<vmem>>, vector<896x128xbf16>
    %cst = arith.constant dense<0.000000e+00> : vector<32x128xf32>
    %2 = tpu.matmul %0, %1, %cst {dimension_numbers = #tpu.dot_dimension_numbers<[1], [0], [0], [1], [0, 0, 1, 1], [], []>} : vector<32x896xbf16>, vector<896x128xbf16>, vector<32x128xf32> -> vector<32x128xf32>
    %c0_3 = arith.constant 0 : index
    %c0_4 = arith.constant 0 : index
    %3 = vector.load %arg3[%c0_3, %c0_4] : memref<32x1xf32, #tpu.memory_space<vmem>>, vector<32x1xf32>
    %4 = vector.broadcast %3 : vector<32x1xf32> to vector<32x128xf32>
    %5 = arith.addf %2, %4 : vector<32x128xf32>
    %cst_5 = arith.constant 0.000000e+00 : f32
    %6 = vector.broadcast %cst_5 : f32 to vector<32x128xf32>
    %7 = arith.cmpf ogt, %5, %6 : vector<32x128xf32>
    %cst_6 = arith.constant 0.00999999977 : f32
    %8 = vector.broadcast %cst_6 : f32 to vector<32x128xf32>
    %9 = arith.mulf %8, %5 : vector<32x128xf32>
    %10 = arith.select %7, %5, %9 : vector<32x128xi1>, vector<32x128xf32>
    %c0_7 = arith.constant 0 : index
    %c0_8 = arith.constant 0 : index
    %11 = vector.load %arg4[%c0_7, %c0_8] : memref<32x1xf32, #tpu.memory_space<vmem>>, vector<32x1xf32>
    %12 = vector.broadcast %11 : vector<32x1xf32> to vector<32x128xf32>
    %13 = arith.mulf %10, %12 : vector<32x128xf32>
    %cst_9 = arith.constant dense<0.000000e+00> : vector<128xf32>
    %14 = vector.multi_reduction <add>, %13, %cst_9 [0] : vector<32x128xf32> to vector<128xf32>
    %15 = vector.shape_cast %14 : vector<128xf32> to vector<1x128xf32>
    %c0_10 = arith.constant 0 : index
    %c0_11 = arith.constant 0 : index
    %16 = vector.load %arg5[%c0_10, %c0_11] : memref<1x1xf32, #tpu.memory_space<vmem>>, vector<1x1xf32>
    %17 = vector.broadcast %16 : vector<1x1xf32> to vector<1x128xf32>
    %18 = arith.addf %15, %17 : vector<1x128xf32>
    %19 = math.tanh %18 : vector<1x128xf32>
    %c0_12 = arith.constant 0 : index
    %c0_13 = arith.constant 0 : index
    %20 = vector.load %arg6[%c0_12, %c0_13] : memref<1x128xf32, #tpu.memory_space<vmem>>, vector<1x128xf32>
    tpu.vector_store %arg6[%c0_12, %c0_13], %19 {strides = array<i32>} : memref<1x128xf32, #tpu.memory_space<vmem>>, vector<1x128xf32>,
    return
  }
  func.func @transform_0(%arg0: i32) -> (i32, i32) {
    %c0_i32 = arith.constant 0 : i32
    %c0_i32_0 = arith.constant 0 : i32
    return %c0_i32, %arg0 : i32, i32
  }
  func.func @transform_1(%arg0: i32) -> (i32, i32) {
    %c0_i32 = arith.constant 0 : i32
    %c0_i32_0 = arith.constant 0 : i32
    %c0_i32_1 = arith.constant 0 : i32
    return %c0_i32, %c0_i32_0 : i32, i32
  }
  func.func @transform_2(%arg0: i32) -> (i32, i32) {
    %c0_i32 = arith.constant 0 : i32
    %c0_i32_0 = arith.constant 0 : i32
    %c0_i32_1 = arith.constant 0 : i32
    return %c0_i32, %c0_i32_0 : i32, i32
  }
  func.func @transform_3(%arg0: i32) -> (i32, i32) {
    %c0_i32 = arith.constant 0 : i32
    %c0_i32_0 = arith.constant 0 : i32
    %c0_i32_1 = arith.constant 0 : i32
    return %c0_i32, %c0_i32_0 : i32, i32
  }
  func.func @transform_4(%arg0: i32) -> (i32, i32) {
    %c0_i32 = arith.constant 0 : i32
    %c0_i32_0 = arith.constant 0 : i32
    %c0_i32_1 = arith.constant 0 : i32
    return %c0_i32, %c0_i32_0 : i32, i32
  }
  func.func @transform_5(%arg0: i32) -> (i32, i32) {
    %c0_i32 = arith.constant 0 : i32
    %c0_i32_0 = arith.constant 0 : i32
    return %c0_i32, %arg0 : i32, i32
  }
}

</mosaic_0001>

<llo_original>
// kernel: tile.13
$region0: #{tile.13}
  #allocation0 [shape = 's32[1]{0}', space=sflag, size = 0x4, scoped, tag = 'scoped memory for tile.13']
  %s0 = inlined_call_operand.vmem [shape: f32[32], index: 0, kind: input, shape index: {}]
  %s1 = inlined_call_operand.vmem [shape: f32[25,32], index: 1, kind: output, shape index: {}]
  // Predicated region
  $region2: #{tile.13} parent=0 // pred_check
    _
  $region3: #{tile.13} parent=0 // pred_check_branch
    %3 = sbr.rel (0) target = $region5
  $region4: #{tile.13} parent=0 // pred_region
    _
  $region5: #{tile.13} parent=0 // pred_fallthru
    _
  %v4 = vld [vmem:[%s0] ss:$0 sm:$0xff]
  %5 = vst [vmem:[%s1] sm:$0xff] %v4
  %s6 = scalar_lea.vmem %s1, 8
  %7 = vst [vmem:[%s6] sm:$0xff] %v4
  %s8 = scalar_lea.vmem %s1, 16
  %9 = vst [vmem:[%s8] sm:$0xff] %v4
  %s10 = scalar_lea.vmem %s1, 24
  %11 = vst [vmem:[%s10] sm:$0xff] %v4

// kernel: mul.11
$region0: #{mul.11}
  %s0 = inlined_call_operand.vmem [shape: f32[25,32], index: 0, kind: input, shape index: {}]
  %s1 = inlined_call_operand.vmem [shape: f32[800], index: 1, kind: output, shape index: {}]
  %v2 = vld [vmem:[%s0] ss:$4 sm:$0x7f]
  %vm3 = vcmask 261120
  %4 = vst.msk [vmem:[%s1] sm:$0x7f] %vm3, %v2
  %s5 = scalar_lea.vmem %s0, 3
  %v6 = vld [vmem:[%s5] ss:$4 sm:$0x3f]
  %7 = vrot.lane.b32.xlu0 %v6, 96
  %v8 = vpop.permute.xlu0 %7
  %vm9 = vcmask 1048320
  %10 = vst.msk [vmem:[%s1] sm:$0x3f] %vm9, %v8
  %s11 = scalar_lea.vmem %s0, 2
  %v12 = vld [vmem:[%s11] ss:$4 sm:$0x3f]
  %13 = vrot.lane.b32.xlu0 %v12, 64
  %v14 = vpop.permute.xlu0 %13
  %vm15 = vcmask 785920
  %16 = vst.msk [vmem:[%s1] sm:$0x3f] %vm15, %v14
  %s17 = scalar_lea.vmem %s0, 1
  %v18 = vld [vmem:[%s17] ss:$4 sm:$0x3f]
  %19 = vrot.lane.b32.xlu0 %v18, 32
  %v20 = vpop.permute.xlu0 %19
  %vm21 = vcmask 523520
  %22 = vst.msk [vmem:[%s1] sm:$0x3f] %vm21, %v20

// kernel: encoder_forward.2
$region0: #{encoder_forward.2}
  #allocation0 [shape = 'u32[]', space=smem, size = 0x4, offset = 0x4, fixed_abs, tag = 'smem constant byte address 0x4 - core index']
  #allocation1 [shape = 'u32[144,128]{1,0:T(1,128)}', space=vmem, size = 0x12000, scoped, tag = 'internal scratch']
  %s0 = inlined_call_operand.vmem [shape: bf16[256,1024], index: 0, kind: input, shape index: {}]
  %s1 = inlined_call_operand.vmem [shape: bf16[32,256], index: 1, kind: input, shape index: {}]
  %s2 = inlined_call_operand.vmem [shape: f32[32,1], index: 2, kind: input, shape index: {}]
  %s3 = inlined_call_operand.vmem [shape: bf16[32,1024], index: 3, kind: output, shape index: {0}]
  %s4 = inlined_call_operand.vmem [shape: f32[32,1], index: 4, kind: output, shape index: {1}]
  %s5 = inlined_call_operand.vmem [shape: f32[32,1], index: 5, kind: output, shape index: {2}]
  %6 = xla_tuple %s3, %s4, %s5
  %s7 = sld [smem:[#allocation0]]
  $region107: #{encoder_forward.2} parent=0
    _
  %s9 = ssub.s32 1, %s7
  %s10 = scalar_select 0, %s9, %s7
  $region1: #{encoder_forward.2} parent=0
    #allocation2 [shape = 'u8[524288]{0}', space=vmem, size = 0x80000, scoped, tag = 'input window, operand 0']
    #allocation3 [shape = 'u8[65536]{0}', space=vmem, size = 0x10000, scoped, tag = 'output window, operand 0']
    loop: start=0, step=1, limit=4
    $region2: #{encoder_forward.2} parent=1 // loop_pre_header
      _
    $region3: #{encoder_forward.2} parent=1 // loop_header
      %s12 = sphi 0, %s16
      %p13 = scmp.ge.s32.totalorder %s12, 4
      %s22 = sphi 0, %s24
      %s25 = sphi 0, %s22
      %s26 = sphi 0, %s25
      %s42 = sphi 0, %s26
      %s46 = sphi 0, %s46
      %s48 = sphi 0, %s46
      %s49 = sphi 0, %s48
      %s63 = sphi 0, %s49
      %s67 = sphi 0, %s67
      %s69 = sphi 0, %s67
      %s70 = sphi 0, %s69
      %s84 = sphi 0, %s70
      %s90 = sphi 0, %s92
      %s93 = sphi 0, %s90
      %s94 = sphi 0, %s93
      %s110 = sphi 0, %s94
      %s114 = sphi 0, %s114
      %s116 = sphi 0, %s114
      %s117 = sphi 0, %s116
      %s131 = sphi 0, %s117
      %s135 = sphi 0, %s135
      %s137 = sphi 0, %s135
      %s138 = sphi 0, %s137
      %s152 = sphi 0, %s138
    $region4: #{encoder_forward.2} parent=1 // loop_header_branch
      %15 = sbr.rel (%p13) target = $region8
    $region5: #{encoder_forward.2} parent=1 // loop_body
      %s17 = ssub.s32 %s12, 1
      %s18 = ssub.s32 %s12, 2
      %s19 = sadd.s32 %s12, 1
      %s20 = ssub.s32 %s12, %s19
      %p21 = scmp.eq.s32.totalorder %s20, 0
      %s23 = sadd.s32 %s22, 1
      %s24 = scalar_select %p21, %s22, %s23
      %p27 = pneg %p21
      %p28 = scmp.eq.s32.totalorder %s12, 1
      %p29 = por %p27, %p28
      %p30 = scmp.ne.s32.totalorder %s22, %s25
      %p31 = scmp.eq.s32.totalorder %s12, 0
      %p32 = por %p30, %p31
      %p33 = scmp.ne.s32.totalorder %s22, %s25
      %p34 = scmp.eq.s32.totalorder %s17, 1
      %p35 = por %p33, %p34
      %p36 = scmp.ne.s32.totalorder %s25, %s26
      %p37 = scmp.eq.s32.totalorder %s17, 0
      %p38 = por %p36, %p37
      %p39 = scmp.ne.s32.totalorder %s25, %s26
      %p40 = scmp.eq.s32.totalorder %s18, 1
      %p41 = por %p39, %p40
      %p43 = scmp.ne.s32.totalorder %s26, %s42
      %p44 = scmp.eq.s32.totalorder %s18, 0
      %p45 = por %p43, %p44
      %s47 = sadd.s32 %s46, 1
      %p50 = scmp.eq.s32.totalorder %s12, 1
      %p51 = scmp.ne.s32.totalorder %s46, %s48
      %p52 = scmp.eq.s32.totalorder %s12, 0
      %p53 = por %p51, %p52
      %p54 = scmp.ne.s32.totalorder %s46, %s48
      %p55 = scmp.eq.s32.totalorder %s17, 1
      %p56 = por %p54, %p55
      %p57 = scmp.ne.s32.totalorder %s48, %s49
      %p58 = scmp.eq.s32.totalorder %s17, 0
      %p59 = por %p57, %p58
      %p60 = scmp.ne.s32.totalorder %s48, %s49
      %p61 = scmp.eq.s32.totalorder %s18, 1
      %p62 = por %p60, %p61
      %p64 = scmp.ne.s32.totalorder %s49, %s63
      %p65 = scmp.eq.s32.totalorder %s18, 0
      %p66 = por %p64, %p65
      %s68 = sadd.s32 %s67, 1
      %p71 = scmp.eq.s32.totalorder %s12, 1
      %p72 = scmp.ne.s32.totalorder %s67, %s69
      %p73 = scmp.eq.s32.totalorder %s12, 0
      %p74 = por %p72, %p73
      %p75 = scmp.ne.s32.totalorder %s67, %s69
      %p76 = scmp.eq.s32.totalorder %s17, 1
      %p77 = por %p75, %p76
      %p78 = scmp.ne.s32.totalorder %s69, %s70
      %p79 = scmp.eq.s32.totalorder %s17, 0
      %p80 = por %p78, %p79
      %p81 = scmp.ne.s32.totalorder %s69, %s70
      %p82 = scmp.eq.s32.totalorder %s18, 1
      %p83 = por %p81, %p82
      %p85 = scmp.ne.s32.totalorder %s70, %s84
      %p86 = scmp.eq.s32.totalorder %s18, 0
      %p87 = por %p85, %p86
      %s88 = ssub.s32 %s12, %s19
      %p89 = scmp.eq.s32.totalorder %s88, 0
      %s91 = sadd.s32 %s90, 1
      %s92 = scalar_select %p89, %s90, %s91
      %p95 = pneg %p89
      %p96 = scmp.eq.s32.totalorder %s12, 1
      %p97 = por %p95, %p96
      %p98 = scmp.ne.s32.totalorder %s90, %s93
      %p99 = scmp.eq.s32.totalorder %s12, 0
      %p100 = por %p98, %p99
      %p101 = scmp.ne.s32.totalorder %s90, %s93
      %p102 = scmp.eq.s32.totalorder %s17, 1
      %p103 = por %p101, %p102
      %p104 = scmp.ne.s32.totalorder %s93, %s94
      %p105 = scmp.eq.s32.totalorder %s17, 0
      %p106 = por %p104, %p105
      %p107 = scmp.ne.s32.totalorder %s93, %s94
      %p108 = scmp.eq.s32.totalorder %s18, 1
      %p109 = por %p107, %p108
      %p111 = scmp.ne.s32.totalorder %s94, %s110
      %p112 = scmp.eq.s32.totalorder %s18, 0
      %p113 = por %p111, %p112
      %s115 = sadd.s32 %s114, 1
      %p118 = scmp.eq.s32.totalorder %s12, 1
      %p119 = scmp.ne.s32.totalorder %s114, %s116
      %p120 = scmp.eq.s32.totalorder %s12, 0
      %p121 = por %p119, %p120
      %p122 = scmp.ne.s32.totalorder %s114, %s116
      %p123 = scmp.eq.s32.totalorder %s17, 1
      %p124 = por %p122, %p123
      %p125 = scmp.ne.s32.totalorder %s116, %s117
      %p126 = scmp.eq.s32.totalorder %s17, 0
      %p127 = por %p125, %p126
      %p128 = scmp.ne.s32.totalorder %s116, %s117
      %p129 = scmp.eq.s32.totalorder %s18, 1
      %p130 = por %p128, %p129
      %p132 = scmp.ne.s32.totalorder %s117, %s131
      %p133 = scmp.eq.s32.totalorder %s18, 0
      %p134 = por %p132, %p133
      %s136 = sadd.s32 %s135, 1
      %p139 = scmp.eq.s32.totalorder %s12, 1
      %p140 = scmp.ne.s32.totalorder %s135, %s137
      %p141 = scmp.eq.s32.totalorder %s12, 0
      %p142 = por %p140, %p141
      %p143 = scmp.ne.s32.totalorder %s135, %s137
      %p144 = scmp.eq.s32.totalorder %s17, 1
      %p145 = por %p143, %p144
      %p146 = scmp.ne.s32.totalorder %s137, %s138
      %p147 = scmp.eq.s32.totalorder %s17, 0
      %p148 = por %p146, %p147
      %p149 = scmp.ne.s32.totalorder %s137, %s138
      %p150 = scmp.eq.s32.totalorder %s18, 1
      %p151 = por %p149, %p150
      %p153 = scmp.ne.s32.totalorder %s138, %s152
      %p154 = scmp.eq.s32.totalorder %s18, 0
      %p155 = por %p153, %p154
      %p156 = scmp.le.s32.totalorder 1, %s12
      %p157 = scmp.lt.s32.totalorder %s12, 3
      %p158 = pnand %p156, %p157
      %p159 = pneg %p158
      // Predicated region
      $region9: #{encoder_forward.2} parent=5 // pred_check
        _
      $region10: #{encoder_forward.2} parent=5 // pred_check_branch
        %161 = sbr.rel (%p158) target = $region12
      $region11: #{encoder_forward.2} parent=5 // pred_region
        %s162 = ssub.s32 %s12, 1
        // Predicated region
        $region13: #{encoder_forward.2} parent=11 // pred_check
          %p163 = pneg %p59
        $region14: #{encoder_forward.2} parent=11 // pred_check_branch
          %165 = sbr.rel (%p163) target = $region16
        $region15: #{encoder_forward.2} parent=11 // pred_region
          _
        $region16: #{encoder_forward.2} parent=11 // pred_fallthru
          _
        // Predicated region
        $region17: #{encoder_forward.2} parent=11 // pred_check
          %p166 = pneg %p80
        $region18: #{encoder_forward.2} parent=11 // pred_check_branch
          %168 = sbr.rel (%p166) target = $region20
        $region19: #{encoder_forward.2} parent=11 // pred_region
          _
        $region20: #{encoder_forward.2} parent=11 // pred_fallthru
          _
      $region12: #{encoder_forward.2} parent=5 // pred_fallthru
        _
      %p169 = scmp.lt.s32.totalorder %s12, 2
      // Predicated region
      $region21: #{encoder_forward.2} parent=5 // pred_check
        %p170 = pneg %p169
      $region22: #{encoder_forward.2} parent=5 // pred_check_branch
        %172 = sbr.rel (%p170) target = $region24
      $region23: #{encoder_forward.2} parent=5 // pred_region
        // Predicated region
        $region25: #{encoder_forward.2} parent=23 // pred_check
          %p173 = pneg %p32
        $region26: #{encoder_forward.2} parent=23 // pred_check_branch
          %175 = sbr.rel (%p173) target = $region28
        $region27: #{encoder_forward.2} parent=23 // pred_region
          %s176 = sand.u32 %s22, 1
          %s177 = sand.u32 %s22, 1
          %s178 = smul.addr %s177, 512
          %s179 = scalar_lea.vmem [#allocation2], %s178
          %s180 = smul.u32 4, %s12
          %s181 = smul.addr %s180, 4
          %s182 = scalar_lea.vmem %s0, %s181
          // Predicated region
          $region29: #{encoder_forward.2} parent=27 // pred_check
            _
          $region30: #{encoder_forward.2} parent=27 // pred_check_branch
            %184 = sbr.rel (0) target = $region32
          $region31: #{encoder_forward.2} parent=27 // pred_region
            // Predicated region
            $region33: #{encoder_forward.2} parent=31 // pred_check
              _
            $region34: #{encoder_forward.2} parent=31 // pred_check_branch
              %186 = sbr.rel (0) target = $region36
            $region35: #{encoder_forward.2} parent=31 // pred_region
              loop: start=0, step=1, limit=1
              $region37: #{encoder_forward.2} parent=35 // loop_pre_header
                _
              $region38: #{encoder_forward.2} parent=35 // loop_header
                %s188 = sphi 0, %s192
                %p189 = scmp.ge.s32.totalorder %s188, 1
                %s193 = sphi %s182, %s182
                %s194 = sphi %s179, %s179
              $region39: #{encoder_forward.2} parent=35 // loop_header_branch
                %191 = sbr.rel (%p189) target = $region43
              $region40: #{encoder_forward.2} parent=35 // loop_body
                %v195 = vld [vmem:[%s193] sm:$0xff]
                %196 = vst [vmem:[%s194] sm:$0xff] %v195
                %v197 = vld [vmem:[%s193 + $0x8] sm:$0xff]
                %198 = vst [vmem:[%s194 + $0x8] sm:$0xff] %v197
                %v199 = vld [vmem:[%s193 + $0x20] sm:$0xff]
                %200 = vst [vmem:[%s194 + $0x10] sm:$0xff] %v199
                %v201 = vld [vmem:[%s193 + $0x28] sm:$0xff]
                %202 = vst [vmem:[%s194 + $0x18] sm:$0xff] %v201
                %v203 = vld [vmem:[%s193 + $0x40] sm:$0xff]
                %204 = vst [vmem:[%s194 + $0x20] sm:$0xff] %v203
                %v205 = vld [vmem:[%s193 + $0x48] sm:$0xff]
                %206 = vst [vmem:[%s194 + $0x28] sm:$0xff] %v205
                %v207 = vld [vmem:[%s193 + $0x60] sm:$0xff]
                %208 = vst [vmem:[%s194 + $0x30] sm:$0xff] %v207
                %v209 = vld [vmem:[%s193 + $0x68] sm:$0xff]
                %210 = vst [vmem:[%s194 + $0x38] sm:$0xff] %v209
                %v211 = vld [vmem:[%s193 + $0x80] sm:$0xff]
                %212 = vst [vmem:[%s194 + $0x40] sm:$0xff] %v211
                %v213 = vld [vmem:[%s193 + $0x88] sm:$0xff]
                %214 = vst [vmem:[%s194 + $0x48] sm:$0xff] %v213
                %v215 = vld [vmem:[%s193 + $0xa0] sm:$0xff]
                %216 = vst [vmem:[%s194 + $0x50] sm:$0xff] %v215
                %v217 = vld [vmem:[%s193 + $0xa8] sm:$0xff]
                %218 = vst [vmem:[%s194 + $0x58] sm:$0xff] %v217
                %v219 = vld [vmem:[%s193 + $0xc0] sm:$0xff]
                %220 = vst [vmem:[%s194 + $0x60] sm:$0xff] %v219
                %v221 = vld [vmem:[%s193 + $0xc8] sm:$0xff]
                %222 = vst [vmem:[%s194 + $0x68] sm:$0xff] %v221
                %v223 = vld [vmem:[%s193 + $0xe0] sm:$0xff]
                %224 = vst [vmem:[%s194 + $0x70] sm:$0xff] %v223
                %v225 = vld [vmem:[%s193 + $0xe8] sm:$0xff]
                %226 = vst [vmem:[%s194 + $0x78] sm:$0xff] %v225
                %v227 = vld [vmem:[%s193 + $0x100] sm:$0xff]
                %228 = vst [vmem:[%s194 + $0x80] sm:$0xff] %v227
                %v229 = vld [vmem:[%s193 + $0x108] sm:$0xff]
                %230 = vst [vmem:[%s194 + $0x88] sm:$0xff] %v229
                %v231 = vld [vmem:[%s193 + $0x120] sm:$0xff]
                %232 = vst [vmem:[%s194 + $0x90] sm:$0xff] %v231
                %v233 = vld [vmem:[%s193 + $0x128] sm:$0xff]
                %234 = vst [vmem:[%s194 + $0x98] sm:$0xff] %v233
                %v235 = vld [vmem:[%s193 + $0x140] sm:$0xff]
                %236 = vst [vmem:[%s194 + $0xa0] sm:$0xff] %v235
                %v237 = vld [vmem:[%s193 + $0x148] sm:$0xff]
                %238 = vst [vmem:[%s194 + $0xa8] sm:$0xff] %v237
                %v239 = vld [vmem:[%s193 + $0x160] sm:$0xff]
                %240 = vst [vmem:[%s194 + $0xb0] sm:$0xff] %v239
                %v241 = vld [vmem:[%s193 + $0x168] sm:$0xff]
                %242 = vst [vmem:[%s194 + $0xb8] sm:$0xff] %v241
                %v243 = vld [vmem:[%s193 + $0x180] sm:$0xff]
                %244 = vst [vmem:[%s194 + $0xc0] sm:$0xff] %v243
                %v245 = vld [vmem:[%s193 + $0x188] sm:$0xff]
                %246 = vst [vmem:[%s194 + $0xc8] sm:$0xff] %v245
                %v247 = vld [vmem:[%s193 + $0x1a0] sm:$0xff]
                %248 = vst [vmem:[%s194 + $0xd0] sm:$0xff] %v247
                %v249 = vld [vmem:[%s193 + $0x1a8] sm:$0xff]
                %250 = vst [vmem:[%s194 + $0xd8] sm:$0xff] %v249
                %v251 = vld [vmem:[%s193 + $0x1c0] sm:$0xff]
                %252 = vst [vmem:[%s194 + $0xe0] sm:$0xff] %v251
                %v253 = vld [vmem:[%s193 + $0x1c8] sm:$0xff]
                %254 = vst [vmem:[%s194 + $0xe8] sm:$0xff] %v253
                %v255 = vld [vmem:[%s193 + $0x1e0] sm:$0xff]
                %256 = vst [vmem:[%s194 + $0xf0] sm:$0xff] %v255
                %v257 = vld [vmem:[%s193 + $0x1e8] sm:$0xff]
                %258 = vst [vmem:[%s194 + $0xf8] sm:$0xff] %v257
                %v259 = vld [vmem:[%s193 + $0x200] sm:$0xff]
                %260 = vst [vmem:[%s194 + $0x100] sm:$0xff] %v259
                %v261 = vld [vmem:[%s193 + $0x208] sm:$0xff]
                %262 = vst [vmem:[%s194 + $0x108] sm:$0xff] %v261
                %v263 = vld [vmem:[%s193 + $0x220] sm:$0xff]
                %264 = vst [vmem:[%s194 + $0x110] sm:$0xff] %v263
                %v265 = vld [vmem:[%s193 + $0x228] sm:$0xff]
                %266 = vst [vmem:[%s194 + $0x118] sm:$0xff] %v265
                %v267 = vld [vmem:[%s193 + $0x240] sm:$0xff]
                %268 = vst [vmem:[%s194 + $0x120] sm:$0xff] %v267
                %v269 = vld [vmem:[%s193 + $0x248] sm:$0xff]
                %270 = vst [vmem:[%s194 + $0x128] sm:$0xff] %v269
                %v271 = vld [vmem:[%s193 + $0x260] sm:$0xff]
                %272 = vst [vmem:[%s194 + $0x130] sm:$0xff] %v271
                %v273 = vld [vmem:[%s193 + $0x268] sm:$0xff]
                %274 = vst [vmem:[%s194 + $0x138] sm:$0xff] %v273
                %v275 = vld [vmem:[%s193 + $0x280] sm:$0xff]
                %276 = vst [vmem:[%s194 + $0x140] sm:$0xff] %v275
                %v277 = vld [vmem:[%s193 + $0x288] sm:$0xff]
                %278 = vst [vmem:[%s194 + $0x148] sm:$0xff] %v277
                %v279 = vld [vmem:[%s193 + $0x2a0] sm:$0xff]
                %280 = vst [vmem:[%s194 + $0x150] sm:$0xff] %v279
                %v281 = vld [vmem:[%s193 + $0x2a8] sm:$0xff]
                %282 = vst [vmem:[%s194 + $0x158] sm:$0xff] %v281
                %v283 = vld [vmem:[%s193 + $0x2c0] sm:$0xff]
                %284 = vst [vmem:[%s194 + $0x160] sm:$0xff] %v283
                %v285 = vld [vmem:[%s193 + $0x2c8] sm:$0xff]
                %286 = vst [vmem:[%s194 + $0x168] sm:$0xff] %v285
                %v287 = vld [vmem:[%s193 + $0x2e0] sm:$0xff]
                %288 = vst [vmem:[%s194 + $0x170] sm:$0xff] %v287
                %v289 = vld [vmem:[%s193 + $0x2e8] sm:$0xff]
                %290 = vst [vmem:[%s194 + $0x178] sm:$0xff] %v289
                %v291 = vld [vmem:[%s193 + $0x300] sm:$0xff]
                %292 = vst [vmem:[%s194 + $0x180] sm:$0xff] %v291
                %v293 = vld [vmem:[%s193 + $0x308] sm:$0xff]
                %294 = vst [vmem:[%s194 + $0x188] sm:$0xff] %v293
                %v295 = vld [vmem:[%s193 + $0x320] sm:$0xff]
                %296 = vst [vmem:[%s194 + $0x190] sm:$0xff] %v295
                %v297 = vld [vmem:[%s193 + $0x328] sm:$0xff]
                %298 = vst [vmem:[%s194 + $0x198] sm:$0xff] %v297
                %v299 = vld [vmem:[%s193 + $0x340] sm:$0xff]
                %300 = vst [vmem:[%s194 + $0x1a0] sm:$0xff] %v299
                %v301 = vld [vmem:[%s193 + $0x348] sm:$0xff]
                %302 = vst [vmem:[%s194 + $0x1a8] sm:$0xff] %v301
                %v303 = vld [vmem:[%s193 + $0x360] sm:$0xff]
                %304 = vst [vmem:[%s194 + $0x1b0] sm:$0xff] %v303
                %v305 = vld [vmem:[%s193 + $0x368] sm:$0xff]
                %306 = vst [vmem:[%s194 + $0x1b8] sm:$0xff] %v305
                %v307 = vld [vmem:[%s193 + $0x380] sm:$0xff]
                %308 = vst [vmem:[%s194 + $0x1c0] sm:$0xff] %v307
                %v309 = vld [vmem:[%s193 + $0x388] sm:$0xff]
                %310 = vst [vmem:[%s194 + $0x1c8] sm:$0xff] %v309
                %v311 = vld [vmem:[%s193 + $0x3a0] sm:$0xff]
                %312 = vst [vmem:[%s194 + $0x1d0] sm:$0xff] %v311
                %v313 = vld [vmem:[%s193 + $0x3a8] sm:$0xff]
                %314 = vst [vmem:[%s194 + $0x1d8] sm:$0xff] %v313
                %v315 = vld [vmem:[%s193 + $0x3c0] sm:$0xff]
                %316 = vst [vmem:[%s194 + $0x1e0] sm:$0xff] %v315
                %v317 = vld [vmem:[%s193 + $0x3c8] sm:$0xff]
                %318 = vst [vmem:[%s194 + $0x1e8] sm:$0xff] %v317
                %v319 = vld [vmem:[%s193 + $0x3e0] sm:$0xff]
                %320 = vst [vmem:[%s194 + $0x1f0] sm:$0xff] %v319
                %v321 = vld [vmem:[%s193 + $0x3e8] sm:$0xff]
                %322 = vst [vmem:[%s194 + $0x1f8] sm:$0xff] %v321
              $region41: #{encoder_forward.2} parent=35 // loop_footer
                %s192 = sadd.s32 1, %s188
              $region42: #{encoder_forward.2} parent=35 // loop_footer_branch
                %187 = sbr.rel target = $region38
              $region43: #{encoder_forward.2} parent=35 // loop_exit
                _
            $region36: #{encoder_forward.2} parent=31 // pred_fallthru
              _
            // Predicated region
            $region44: #{encoder_forward.2} parent=31 // pred_check
              _
            $region45: #{encoder_forward.2} parent=31 // pred_check_branch
              %324 = sbr.rel target = $region47
            $region46: #{encoder_forward.2} parent=31 // pred_region
              _
            $region47: #{encoder_forward.2} parent=31 // pred_fallthru
              _
          $region32: #{encoder_forward.2} parent=27 // pred_fallthru
            _
          %325 = vnop
        $region28: #{encoder_forward.2} parent=23 // pred_fallthru
          _
      $region24: #{encoder_forward.2} parent=5 // pred_fallthru
        _
      %p326 = scmp.le.s32.totalorder 1, %s12
      %p327 = scmp.lt.s32.totalorder %s12, 3
      %p328 = pnand %p326, %p327
      %p329 = pneg %p328
      // Predicated region
      $region48: #{encoder_forward.2} parent=5 // pred_check
        _
      $region49: #{encoder_forward.2} parent=5 // pred_check_branch
        %331 = sbr.rel (%p328) target = $region51
      $region50: #{encoder_forward.2} parent=5 // pred_region
        %s332 = ssub.s32 %s12, 1
        %s333 = sand.u32 %s25, 1
        %s334 = sand.u32 %s25, 1
        %s335 = smul.addr %s334, 512
        %s336 = scalar_lea.vmem [#allocation2], %s335
        // Predicated region
        $region52: #{encoder_forward.2} parent=50 // pred_check
          %p337 = pneg %p38
        $region53: #{encoder_forward.2} parent=50 // pred_check_branch
          %339 = sbr.rel (%p337) target = $region55
        $region54: #{encoder_forward.2} parent=50 // pred_region
          _
        $region55: #{encoder_forward.2} parent=50 // pred_fallthru
          _
        %s340 = sand.u32 %s25, 1
        %s341 = sand.u32 %s25, 1
        %s342 = smul.addr %s341, 512
        %s343 = scalar_lea.vmem [#allocation2], %s342
        %p344 = pneg %p38
        %p345 = pneg %p35
        %p346 = pneg %p59
        %p347 = pneg %p56
        %p348 = pneg %p80
        %p349 = pneg %p77
        %p350 = pneg %p106
        %p351 = pneg %p103
        %s352 = sand.u32 %s93, 1
        %s353 = sand.u32 %s93, 1
        %s354 = smul.addr %s353, 64
        %s355 = scalar_lea.vmem [#allocation3], %s354
        %p356 = pneg %p127
        %p357 = pneg %p124
        %p358 = pneg %p148
        %p359 = pneg %p145
        %s360 = smul.u32 4, %s17
        %s361 = smul.u32 4, %s17
        %v362 = vld [vmem:[%s1] sm:$0xff]
        %v363 = vld [vmem:[%s1 + $0x8] sm:$0xff]
        %v364 = vld [vmem:[%s1 + $0x10] sm:$0xff]
        %v365 = vld [vmem:[%s1 + $0x18] sm:$0xff]
        %v366 = vld [vmem:[%s336] sm:$0xff]
        %v367 = vld [vmem:[%s336 + $0x8] sm:$0xff]
        %v368 = vld [vmem:[%s336 + $0x10] sm:$0xff]
        %v369 = vld [vmem:[%s336 + $0x18] sm:$0xff]
        %v370 = vld [vmem:[%s336 + $0x20] sm:$0xff]
        %v371 = vld [vmem:[%s336 + $0x28] sm:$0xff]
        %v372 = vld [vmem:[%s336 + $0x30] sm:$0xff]
        %v373 = vld [vmem:[%s336 + $0x38] sm:$0xff]
        %v374 = vld [vmem:[%s336 + $0x40] sm:$0xff]
        %v375 = vld [vmem:[%s336 + $0x48] sm:$0xff]
        %v376 = vld [vmem:[%s336 + $0x50] sm:$0xff]
        %v377 = vld [vmem:[%s336 + $0x58] sm:$0xff]
        %v378 = vld [vmem:[%s336 + $0x60] sm:$0xff]
        %v379 = vld [vmem:[%s336 + $0x68] sm:$0xff]
        %v380 = vld [vmem:[%s336 + $0x70] sm:$0xff]
        %v381 = vld [vmem:[%s336 + $0x78] sm:$0xff]
        %v382 = vld [vmem:[%s336 + $0x80] sm:$0xff]
        %v383 = vld [vmem:[%s336 + $0x88] sm:$0xff]
        %v384 = vld [vmem:[%s336 + $0x90] sm:$0xff]
        %v385 = vld [vmem:[%s336 + $0x98] sm:$0xff]
        %v386 = vld [vmem:[%s336 + $0xa0] sm:$0xff]
        %v387 = vld [vmem:[%s336 + $0xa8] sm:$0xff]
        %v388 = vld [vmem:[%s336 + $0xb0] sm:$0xff]
        %v389 = vld [vmem:[%s336 + $0xb8] sm:$0xff]
        %v390 = vld [vmem:[%s336 + $0xc0] sm:$0xff]
        %v391 = vld [vmem:[%s336 + $0xc8] sm:$0xff]
        %v392 = vld [vmem:[%s336 + $0xd0] sm:$0xff]
        %v393 = vld [vmem:[%s336 + $0xd8] sm:$0xff]
        %v394 = vld [vmem:[%s336 + $0xe0] sm:$0xff]
        %v395 = vld [vmem:[%s336 + $0xe8] sm:$0xff]
        %v396 = vld [vmem:[%s336 + $0xf0] sm:$0xff]
        %v397 = vld [vmem:[%s336 + $0xf8] sm:$0xff]
        %v398 = vld [vmem:[%s336 + $0x100] sm:$0xff]
        %v399 = vld [vmem:[%s336 + $0x108] sm:$0xff]
        %v400 = vld [vmem:[%s336 + $0x110] sm:$0xff]
        %v401 = vld [vmem:[%s336 + $0x118] sm:$0xff]
        %v402 = vld [vmem:[%s336 + $0x120] sm:$0xff]
        %v403 = vld [vmem:[%s336 + $0x128] sm:$0xff]
        %v404 = vld [vmem:[%s336 + $0x130] sm:$0xff]
        %v405 = vld [vmem:[%s336 + $0x138] sm:$0xff]
        %v406 = vld [vmem:[%s336 + $0x140] sm:$0xff]
        %v407 = vld [vmem:[%s336 + $0x148] sm:$0xff]
        %v408 = vld [vmem:[%s336 + $0x150] sm:$0xff]
        %v409 = vld [vmem:[%s336 + $0x158] sm:$0xff]
        %v410 = vld [vmem:[%s336 + $0x160] sm:$0xff]
        %v411 = vld [vmem:[%s336 + $0x168] sm:$0xff]
        %v412 = vld [vmem:[%s336 + $0x170] sm:$0xff]
        %v413 = vld [vmem:[%s336 + $0x178] sm:$0xff]
        %v414 = vld [vmem:[%s336 + $0x180] sm:$0xff]
        %v415 = vld [vmem:[%s336 + $0x188] sm:$0xff]
        %v416 = vld [vmem:[%s336 + $0x190] sm:$0xff]
        %v417 = vld [vmem:[%s336 + $0x198] sm:$0xff]
        %v418 = vld [vmem:[%s336 + $0x1a0] sm:$0xff]
        %v419 = vld [vmem:[%s336 + $0x1a8] sm:$0xff]
        %v420 = vld [vmem:[%s336 + $0x1b0] sm:$0xff]
        %v421 = vld [vmem:[%s336 + $0x1b8] sm:$0xff]
        %v422 = vld [vmem:[%s336 + $0x1c0] sm:$0xff]
        %v423 = vld [vmem:[%s336 + $0x1c8] sm:$0xff]
        %v424 = vld [vmem:[%s336 + $0x1d0] sm:$0xff]
        %v425 = vld [vmem:[%s336 + $0x1d8] sm:$0xff]
        %v426 = vld [vmem:[%s336 + $0x1e0] sm:$0xff]
        %v427 = vld [vmem:[%s336 + $0x1e8] sm:$0xff]
        %v428 = vld [vmem:[%s336 + $0x1f0] sm:$0xff]
        %v429 = vld [vmem:[%s336 + $0x1f8] sm:$0xff]
        %v430 = vld [vmem:[%s2] sm:$0xff]
        %v431 = vld [vmem:[%s2 + $0x8] sm:$0xff]
        %v432 = vld [vmem:[%s2 + $0x10] sm:$0xff]
        %v433 = vld [vmem:[%s2 + $0x18] sm:$0xff]
        %435 = vset.pattern.permute.xlu0 0
        %436 = vperm.xlu0 %435, %v430
        %v437 = vpop.permute.xlu0 %436
        %440 = vset.pattern.permute.xlu0 0
        %441 = vperm.xlu0 %440, %v431
        %v442 = vpop.permute.xlu0 %441
        %445 = vset.pattern.permute.xlu0 0
        %446 = vperm.xlu0 %445, %v432
        %v447 = vpop.permute.xlu0 %446
        %450 = vset.pattern.permute.xlu0 0
        %451 = vperm.xlu0 %450, %v433
        %v452 = vpop.permute.xlu0 %451
        %v458 = vunpack.c.l.b16 %v362
        %v459 = vunpack.c.h.b16 %v362
        %v460 = vunpack.c.l.b16 %v363
        %v461 = vunpack.c.h.b16 %v363
        %v462 = vunpack.c.l.b16 %v364
        %v463 = vunpack.c.h.b16 %v364
        %v464 = vunpack.c.l.b16 %v365
        %v465 = vunpack.c.h.b16 %v365
        %v466 = vpack.c.b16 %v460, %v458
        %v467 = vpack.c.b16 %v461, %v459
        %v468 = vpack.c.b16 %v464, %v462
        %v469 = vpack.c.b16 %v465, %v463
        %v538 = vunpack.c.l.b16 %v366
        %v539 = vunpack.c.h.b16 %v366
        %v540 = vunpack.c.l.b16 %v367
        %v541 = vunpack.c.h.b16 %v367
        %v542 = vunpack.c.l.b16 %v368
        %v543 = vunpack.c.h.b16 %v368
        %v544 = vunpack.c.l.b16 %v369
        %v545 = vunpack.c.h.b16 %v369
        %v546 = vunpack.c.l.b16 %v370
        %v547 = vunpack.c.h.b16 %v370
        %v548 = vunpack.c.l.b16 %v371
        %v549 = vunpack.c.h.b16 %v371
        %v550 = vunpack.c.l.b16 %v372
        %v551 = vunpack.c.h.b16 %v372
        %v552 = vunpack.c.l.b16 %v373
        %v553 = vunpack.c.h.b16 %v373
        %v554 = vunpack.c.l.b16 %v374
        %v555 = vunpack.c.h.b16 %v374
        %v556 = vunpack.c.l.b16 %v375
        %v557 = vunpack.c.h.b16 %v375
        %v558 = vunpack.c.l.b16 %v376
        %v559 = vunpack.c.h.b16 %v376
        %v560 = vunpack.c.l.b16 %v377
        %v561 = vunpack.c.h.b16 %v377
        %v562 = vunpack.c.l.b16 %v378
        %v563 = vunpack.c.h.b16 %v378
        %v564 = vunpack.c.l.b16 %v379
        %v565 = vunpack.c.h.b16 %v379
        %v566 = vunpack.c.l.b16 %v380
        %v567 = vunpack.c.h.b16 %v380
        %v568 = vunpack.c.l.b16 %v381
        %v569 = vunpack.c.h.b16 %v381
        %v570 = vunpack.c.l.b16 %v382
        %v571 = vunpack.c.h.b16 %v382
        %v572 = vunpack.c.l.b16 %v383
        %v573 = vunpack.c.h.b16 %v383
        %v574 = vunpack.c.l.b16 %v384
        %v575 = vunpack.c.h.b16 %v384
        %v576 = vunpack.c.l.b16 %v385
        %v577 = vunpack.c.h.b16 %v385
        %v578 = vunpack.c.l.b16 %v386
        %v579 = vunpack.c.h.b16 %v386
        %v580 = vunpack.c.l.b16 %v387
        %v581 = vunpack.c.h.b16 %v387
        %v582 = vunpack.c.l.b16 %v388
        %v583 = vunpack.c.h.b16 %v388
        %v584 = vunpack.c.l.b16 %v389
        %v585 = vunpack.c.h.b16 %v389
        %v586 = vunpack.c.l.b16 %v390
        %v587 = vunpack.c.h.b16 %v390
        %v588 = vunpack.c.l.b16 %v391
        %v589 = vunpack.c.h.b16 %v391
        %v590 = vunpack.c.l.b16 %v392
        %v591 = vunpack.c.h.b16 %v392
        %v592 = vunpack.c.l.b16 %v393
        %v593 = vunpack.c.h.b16 %v393
        %v594 = vunpack.c.l.b16 %v394
        %v595 = vunpack.c.h.b16 %v394
        %v596 = vunpack.c.l.b16 %v395
        %v597 = vunpack.c.h.b16 %v395
        %v598 = vunpack.c.l.b16 %v396
        %v599 = vunpack.c.h.b16 %v396
        %v600 = vunpack.c.l.b16 %v397
        %v601 = vunpack.c.h.b16 %v397
        %v602 = vunpack.c.l.b16 %v398
        %v603 = vunpack.c.h.b16 %v398
        %v604 = vunpack.c.l.b16 %v399
        %v605 = vunpack.c.h.b16 %v399
        %v606 = vunpack.c.l.b16 %v400
        %v607 = vunpack.c.h.b16 %v400
        %v608 = vunpack.c.l.b16 %v401
        %v609 = vunpack.c.h.b16 %v401
        %v610 = vunpack.c.l.b16 %v402
        %v611 = vunpack.c.h.b16 %v402
        %v612 = vunpack.c.l.b16 %v403
        %v613 = vunpack.c.h.b16 %v403
        %v614 = vunpack.c.l.b16 %v404
        %v615 = vunpack.c.h.b16 %v404
        %v616 = vunpack.c.l.b16 %v405
        %v617 = vunpack.c.h.b16 %v405
        %v618 = vunpack.c.l.b16 %v406
        %v619 = vunpack.c.h.b16 %v406
        %v620 = vunpack.c.l.b16 %v407
        %v621 = vunpack.c.h.b16 %v407
        %v622 = vunpack.c.l.b16 %v408
        %v623 = vunpack.c.h.b16 %v408
        %v624 = vunpack.c.l.b16 %v409
        %v625 = vunpack.c.h.b16 %v409
        %v626 = vunpack.c.l.b16 %v410
        %v627 = vunpack.c.h.b16 %v410
        %v628 = vunpack.c.l.b16 %v411
        %v629 = vunpack.c.h.b16 %v411
        %v630 = vunpack.c.l.b16 %v412
        %v631 = vunpack.c.h.b16 %v412
        %v632 = vunpack.c.l.b16 %v413
        %v633 = vunpack.c.h.b16 %v413
        %v634 = vunpack.c.l.b16 %v414
        %v635 = vunpack.c.h.b16 %v414
        %v636 = vunpack.c.l.b16 %v415
        %v637 = vunpack.c.h.b16 %v415
        %v638 = vunpack.c.l.b16 %v416
        %v639 = vunpack.c.h.b16 %v416
        %v640 = vunpack.c.l.b16 %v417
        %v641 = vunpack.c.h.b16 %v417
        %v642 = vunpack.c.l.b16 %v418
        %v643 = vunpack.c.h.b16 %v418
        %v644 = vunpack.c.l.b16 %v419
        %v645 = vunpack.c.h.b16 %v419
        %v646 = vunpack.c.l.b16 %v420
        %v647 = vunpack.c.h.b16 %v420
        %v648 = vunpack.c.l.b16 %v421
        %v649 = vunpack.c.h.b16 %v421
        %v650 = vunpack.c.l.b16 %v422
        %v651 = vunpack.c.h.b16 %v422
        %v652 = vunpack.c.l.b16 %v423
        %v653 = vunpack.c.h.b16 %v423
        %v654 = vunpack.c.l.b16 %v424
        %v655 = vunpack.c.h.b16 %v424
        %v656 = vunpack.c.l.b16 %v425
        %v657 = vunpack.c.h.b16 %v425
        %v658 = vunpack.c.l.b16 %v426
        %v659 = vunpack.c.h.b16 %v426
        %v660 = vunpack.c.l.b16 %v427
        %v661 = vunpack.c.h.b16 %v427
        %v662 = vunpack.c.l.b16 %v428
        %v663 = vunpack.c.h.b16 %v428
        %v664 = vunpack.c.l.b16 %v429
        %v665 = vunpack.c.h.b16 %v429
        %v666 = vpack.c.b16 %v542, %v538
        %v667 = vpack.c.b16 %v543, %v539
        %v668 = vpack.c.b16 %v544, %v540
        %v669 = vpack.c.b16 %v545, %v541
        %v670 = vpack.c.b16 %v550, %v546
        %v671 = vpack.c.b16 %v551, %v547
        %v672 = vpack.c.b16 %v552, %v548
        %v673 = vpack.c.b16 %v553, %v549
        %v674 = vpack.c.b16 %v558, %v554
        %v675 = vpack.c.b16 %v559, %v555
        %v676 = vpack.c.b16 %v560, %v556
        %v677 = vpack.c.b16 %v561, %v557
        %v678 = vpack.c.b16 %v566, %v562
        %v679 = vpack.c.b16 %v567, %v563
        %v680 = vpack.c.b16 %v568, %v564
        %v681 = vpack.c.b16 %v569, %v565
        %v682 = vpack.c.b16 %v574, %v570
        %v683 = vpack.c.b16 %v575, %v571
        %v684 = vpack.c.b16 %v576, %v572
        %v685 = vpack.c.b16 %v577, %v573
        %v686 = vpack.c.b16 %v582, %v578
        %v687 = vpack.c.b16 %v583, %v579
        %v688 = vpack.c.b16 %v584, %v580
        %v689 = vpack.c.b16 %v585, %v581
        %v690 = vpack.c.b16 %v590, %v586
        %v691 = vpack.c.b16 %v591, %v587
        %v692 = vpack.c.b16 %v592, %v588
        %v693 = vpack.c.b16 %v593, %v589
        %v694 = vpack.c.b16 %v598, %v594
        %v695 = vpack.c.b16 %v599, %v595
        %v696 = vpack.c.b16 %v600, %v596
        %v697 = vpack.c.b16 %v601, %v597
        %v698 = vpack.c.b16 %v606, %v602
        %v699 = vpack.c.b16 %v607, %v603
        %v700 = vpack.c.b16 %v608, %v604
        %v701 = vpack.c.b16 %v609, %v605
        %v702 = vpack.c.b16 %v614, %v610
        %v703 = vpack.c.b16 %v615, %v611
        %v704 = vpack.c.b16 %v616, %v612
        %v705 = vpack.c.b16 %v617, %v613
        %v706 = vpack.c.b16 %v622, %v618
        %v707 = vpack.c.b16 %v623, %v619
        %v708 = vpack.c.b16 %v624, %v620
        %v709 = vpack.c.b16 %v625, %v621
        %v710 = vpack.c.b16 %v630, %v626
        %v711 = vpack.c.b16 %v631, %v627
        %v712 = vpack.c.b16 %v632, %v628
        %v713 = vpack.c.b16 %v633, %v629
        %v714 = vpack.c.b16 %v638, %v634
        %v715 = vpack.c.b16 %v639, %v635
        %v716 = vpack.c.b16 %v640, %v636
        %v717 = vpack.c.b16 %v641, %v637
        %v718 = vpack.c.b16 %v646, %v642
        %v719 = vpack.c.b16 %v647, %v643
        %v720 = vpack.c.b16 %v648, %v644
        %v721 = vpack.c.b16 %v649, %v645
        %v722 = vpack.c.b16 %v654, %v650
        %v723 = vpack.c.b16 %v655, %v651
        %v724 = vpack.c.b16 %v656, %v652
        %v725 = vpack.c.b16 %v657, %v653
        %v726 = vpack.c.b16 %v662, %v658
        %v727 = vpack.c.b16 %v663, %v659
        %v728 = vpack.c.b16 %v664, %v660
        %v729 = vpack.c.b16 %v665, %v661
        %794 = vmatprep.subr.bf16.mxu0 %v695
        %795 = vmatpush1.bf16.msra.mxu0 %v694
        %796 = vmatprep.subr.bf16.mxu0 %v691
        %797 = vmatpush1.bf16.msra.mxu0 %v690
        %798 = vmatprep.subr.bf16.mxu0 %v687
        %799 = vmatpush1.bf16.msra.mxu0 %v686
        %800 = vmatprep.subr.bf16.mxu0 %v683
        %801 = vmatpush1.bf16.msra.mxu0 %v682
        %802 = vmatprep.subr.bf16.mxu0 %v679
        %803 = vmatpush1.bf16.msra.mxu0 %v678
        %804 = vmatprep.subr.bf16.mxu0 %v675
        %805 = vmatpush1.bf16.msra.mxu0 %v674
        %806 = vmatprep.subr.bf16.mxu0 %v671
        %807 = vmatpush1.bf16.msra.mxu0 %v670
        %808 = vmatprep.subr.bf16.mxu0 %v667
        %809 = vmatpush1.bf16.msra.mxu0 %v666
        %810 = vmatprep.subr.bf16.mxu0 %v727
        %811 = vmatpush2.bf16.msra.mxu0 %v726
        %812 = vmatprep.subr.bf16.mxu0 %v723
        %813 = vmatpush2.bf16.msra.mxu0 %v722
        %814 = vmatprep.subr.bf16.mxu0 %v719
        %815 = vmatpush2.bf16.msra.mxu0 %v718
        %816 = vmatprep.subr.bf16.mxu0 %v715
        %817 = vmatpush2.bf16.msra.mxu0 %v714
        %818 = vmatprep.subr.bf16.mxu0 %v711
        %819 = vmatpush2.bf16.msra.mxu0 %v710
        %820 = vmatprep.subr.bf16.mxu0 %v707
        %821 = vmatpush2.bf16.msra.mxu0 %v706
        %822 = vmatprep.subr.bf16.mxu0 %v703
        %823 = vmatpush2.bf16.msra.mxu0 %v702
        %824 = vmatprep.subr.bf16.mxu0 %v699
        %825 = vmatpush2.bf16.msra.mxu0 %v698
        %826 = vmatprep.mubr.bf16.mxu0 %v467
        %827 = vmatmul.mubr.bf16.gmra.mxu0 %v466
        %v828 = vpop.f32.mrf.mxu0
        %v829 = vadd.f32 %v437, %v828
        %v830 = vpop.f32.mrf.mxu0
        %v831 = vadd.f32 %v437, %v830
        %v832 = vpop.f32.mrf.mxu0
        %v833 = vadd.f32 %v442, %v832
        %v834 = vpop.f32.mrf.mxu0
        %v835 = vadd.f32 %v442, %v834
        %836 = vmatprep.mubr.bf16.mxu0 %v469
        %837 = vmatmul.mubr.bf16.gmra.mxu0 %v468
        %v838 = vpop.f32.mrf.mxu0
        %v839 = vadd.f32 %v447, %v838
        %v840 = vpop.f32.mrf.mxu0
        %v841 = vadd.f32 %v447, %v840
        %v842 = vpop.f32.mrf.mxu0
        %v843 = vadd.f32 %v452, %v842
        %v844 = vpop.f32.mrf.mxu0
        %v845 = vadd.f32 %v452, %v844
        %846 = vdwg.mxu0
        %847 = vmatprep.subr.bf16.mxu0 %v697
        %848 = vmatpush1.bf16.msra.mxu0 %v696
        %849 = vmatprep.subr.bf16.mxu0 %v693
        %850 = vmatpush1.bf16.msra.mxu0 %v692
        %851 = vmatprep.subr.bf16.mxu0 %v689
        %852 = vmatpush1.bf16.msra.mxu0 %v688
        %853 = vmatprep.subr.bf16.mxu0 %v685
        %854 = vmatpush1.bf16.msra.mxu0 %v684
        %855 = vmatprep.subr.bf16.mxu0 %v681
        %856 = vmatpush1.bf16.msra.mxu0 %v680
        %857 = vmatprep.subr.bf16.mxu0 %v677
        %858 = vmatpush1.bf16.msra.mxu0 %v676
        %859 = vmatprep.subr.bf16.mxu0 %v673
        %860 = vmatpush1.bf16.msra.mxu0 %v672
        %861 = vmatprep.subr.bf16.mxu0 %v669
        %862 = vmatpush1.bf16.msra.mxu0 %v668
        %863 = vmatprep.subr.bf16.mxu0 %v729
        %864 = vmatpush2.bf16.msra.mxu0 %v728
        %865 = vmatprep.subr.bf16.mxu0 %v725
        %866 = vmatpush2.bf16.msra.mxu0 %v724
        %867 = vmatprep.subr.bf16.mxu0 %v721
        %868 = vmatpush2.bf16.msra.mxu0 %v720
        %869 = vmatprep.subr.bf16.mxu0 %v717
        %870 = vmatpush2.bf16.msra.mxu0 %v716
        %871 = vmatprep.subr.bf16.mxu0 %v713
        %872 = vmatpush2.bf16.msra.mxu0 %v712
        %873 = vmatprep.subr.bf16.mxu0 %v709
        %874 = vmatpush2.bf16.msra.mxu0 %v708
        %875 = vmatprep.subr.bf16.mxu0 %v705
        %876 = vmatpush2.bf16.msra.mxu0 %v704
        %877 = vmatprep.subr.bf16.mxu0 %v701
        %878 = vmatpush2.bf16.msra.mxu0 %v700
        %879 = vmatprep.mubr.bf16.mxu0 %v467
        %880 = vmatmul.mubr.bf16.gmra.mxu0 %v466
        %v881 = vpop.f32.mrf.mxu0
        %v882 = vadd.f32 %v437, %v881
        %v883 = vpop.f32.mrf.mxu0
        %v884 = vadd.f32 %v437, %v883
        %v885 = vpop.f32.mrf.mxu0
        %v886 = vadd.f32 %v442, %v885
        %v887 = vpop.f32.mrf.mxu0
        %v888 = vadd.f32 %v442, %v887
        %889 = vmatprep.mubr.bf16.mxu0 %v469
        %890 = vmatmul.mubr.bf16.gmra.mxu0 %v468
        %v891 = vpop.f32.mrf.mxu0
        %v892 = vadd.f32 %v447, %v891
        %v893 = vpop.f32.mrf.mxu0
        %v894 = vadd.f32 %v447, %v893
        %v895 = vpop.f32.mrf.mxu0
        %v896 = vadd.f32 %v452, %v895
        %v897 = vpop.f32.mrf.mxu0
        %v898 = vadd.f32 %v452, %v897
        %899 = vdwg.mxu0
        %vm900 = vcmp.gt.f32.partialorder %v829, 0.0
        %vm901 = vcmp.gt.f32.partialorder %v831, 0.0
        %vm902 = vcmp.gt.f32.partialorder %v882, 0.0
        %vm903 = vcmp.gt.f32.partialorder %v884, 0.0
        %vm904 = vcmp.gt.f32.partialorder %v833, 0.0
        %vm905 = vcmp.gt.f32.partialorder %v835, 0.0
        %vm906 = vcmp.gt.f32.partialorder %v886, 0.0
        %vm907 = vcmp.gt.f32.partialorder %v888, 0.0
        %vm908 = vcmp.gt.f32.partialorder %v839, 0.0
        %vm909 = vcmp.gt.f32.partialorder %v841, 0.0
        %vm910 = vcmp.gt.f32.partialorder %v892, 0.0
        %vm911 = vcmp.gt.f32.partialorder %v894, 0.0
        %vm912 = vcmp.gt.f32.partialorder %v843, 0.0
        %vm913 = vcmp.gt.f32.partialorder %v845, 0.0
        %vm914 = vcmp.gt.f32.partialorder %v896, 0.0
        %vm915 = vcmp.gt.f32.partialorder %v898, 0.0
        %v916 = vmul.f32 %v829, 0.01
        %v917 = vmul.f32 %v831, 0.01
        %v918 = vmul.f32 %v882, 0.01
        %v919 = vmul.f32 %v884, 0.01
        %v920 = vmul.f32 %v833, 0.01
        %v921 = vmul.f32 %v835, 0.01
        %v922 = vmul.f32 %v886, 0.01
        %v923 = vmul.f32 %v888, 0.01
        %v924 = vmul.f32 %v839, 0.01
        %v925 = vmul.f32 %v841, 0.01
        %v926 = vmul.f32 %v892, 0.01
        %v927 = vmul.f32 %v894, 0.01
        %v928 = vmul.f32 %v843, 0.01
        %v929 = vmul.f32 %v845, 0.01
        %v930 = vmul.f32 %v896, 0.01
        %v931 = vmul.f32 %v898, 0.01
        %v932 = vsel %vm900, %v829, %v916
        %v933 = vsel %vm901, %v831, %v917
        %v934 = vsel %vm902, %v882, %v918
        %v935 = vsel %vm903, %v884, %v919
        %v936 = vsel %vm904, %v833, %v920
        %v937 = vsel %vm905, %v835, %v921
        %v938 = vsel %vm906, %v886, %v922
        %v939 = vsel %vm907, %v888, %v923
        %v940 = vsel %vm908, %v839, %v924
        %v941 = vsel %vm909, %v841, %v925
        %v942 = vsel %vm910, %v892, %v926
        %v943 = vsel %vm911, %v894, %v927
        %v944 = vsel %vm912, %v843, %v928
        %v945 = vsel %vm913, %v845, %v929
        %v946 = vsel %vm914, %v896, %v930
        %v947 = vsel %vm915, %v898, %v931
        %v948 = vpack.c.bf16 %v936, %v932
        %v949 = vpack.c.bf16 %v937, %v933
        %v950 = vpack.c.bf16 %v938, %v934
        %v951 = vpack.c.bf16 %v939, %v935
        %v952 = vpack.c.bf16 %v944, %v940
        %v953 = vpack.c.bf16 %v945, %v941
        %v954 = vpack.c.bf16 %v946, %v942
        %v955 = vpack.c.bf16 %v947, %v943
        %v964 = vunpack.c.l.b16 %v948
        %v965 = vunpack.c.l.b16 %v949
        %v966 = vunpack.c.l.b16 %v950
        %v967 = vunpack.c.l.b16 %v951
        %v968 = vunpack.c.h.b16 %v948
        %v969 = vunpack.c.h.b16 %v949
        %v970 = vunpack.c.h.b16 %v950
        %v971 = vunpack.c.h.b16 %v951
        %v972 = vunpack.c.l.b16 %v952
        %v973 = vunpack.c.l.b16 %v953
        %v974 = vunpack.c.l.b16 %v954
        %v975 = vunpack.c.l.b16 %v955
        %v976 = vunpack.c.h.b16 %v952
        %v977 = vunpack.c.h.b16 %v953
        %v978 = vunpack.c.h.b16 %v954
        %v979 = vunpack.c.h.b16 %v955
        %v980 = vpack.c.b16 %v965, %v964
        %v981 = vpack.c.b16 %v967, %v966
        %v982 = vpack.c.b16 %v969, %v968
        %v983 = vpack.c.b16 %v971, %v970
        %v984 = vpack.c.b16 %v973, %v972
        %v985 = vpack.c.b16 %v975, %v974
        %v986 = vpack.c.b16 %v977, %v976
        %v987 = vpack.c.b16 %v979, %v978
        %996 = vst [vmem:[%s355] sm:$0xff] %v980
        %997 = vst [vmem:[%s355 + $0x8] sm:$0xff] %v981
        %998 = vst [vmem:[%s355 + $0x10] sm:$0xff] %v982
        %999 = vst [vmem:[%s355 + $0x18] sm:$0xff] %v983
        %1000 = vst [vmem:[%s355 + $0x20] sm:$0xff] %v984
        %1001 = vst [vmem:[%s355 + $0x28] sm:$0xff] %v985
        %1002 = vst [vmem:[%s355 + $0x30] sm:$0xff] %v986
        %1003 = vst [vmem:[%s355 + $0x38] sm:$0xff] %v987
        %v1004 = vlaneseq
        %v1005 = vand.u32 %v1004, 127
        %v1006 = vadd.s32 %v1005, 128
        %v1007 = vadd.s32 %v1005, 256
        %v1008 = vadd.s32 %v1005, 384
        %s1009 = smul.u32 %s17, 512
        %v1010 = vstv %s1009
        %v1011 = vadd.s32 %v1005, %v1010
        %v1012 = vadd.s32 %v1006, %v1010
        %v1013 = vadd.s32 %v1007, %v1010
        %v1014 = vadd.s32 %v1008, %v1010
        %vm1015 = vcmp.lt.s32.totalorder %v1011, 800
        %vm1016 = vcmp.lt.s32.totalorder %v1012, 800
        %vm1017 = vcmp.lt.s32.totalorder %v1013, 800
        %vm1018 = vcmp.lt.s32.totalorder %v1014, 800
        %v1019 = vsel %vm1015, 1, 0
        %v1020 = vsel %vm1016, 1, 0
        %v1021 = vsel %vm1017, 1, 0
        %v1022 = vsel %vm1018, 1, 0
        %v1023 = vcvt.s32.f32 %v1019
        %v1024 = vcvt.s32.f32 %v1020
        %v1025 = vcvt.s32.f32 %v1021
        %v1026 = vcvt.s32.f32 %v1022
        %v1027 = vmul.f32 %v932, %v1023
        %v1028 = vmul.f32 %v933, %v1024
        %v1029 = vmul.f32 %v934, %v1025
        %v1030 = vmul.f32 %v935, %v1026
        %v1031 = vmul.f32 %v936, %v1023
        %v1032 = vmul.f32 %v937, %v1024
        %v1033 = vmul.f32 %v938, %v1025
        %v1034 = vmul.f32 %v939, %v1026
        %v1035 = vmul.f32 %v940, %v1023
        %v1036 = vmul.f32 %v941, %v1024
        %v1037 = vmul.f32 %v942, %v1025
        %v1038 = vmul.f32 %v943, %v1026
        %v1039 = vmul.f32 %v944, %v1023
        %v1040 = vmul.f32 %v945, %v1024
        %v1041 = vmul.f32 %v946, %v1025
        %v1042 = vmul.f32 %v947, %v1026
        %p1043 = scmp.eq.s32.totalorder %s17, 0
        // Predicated region
        $region56: #{encoder_forward.2} parent=50 // pred_check
          %p1044 = pneg %p1043
        $region57: #{encoder_forward.2} parent=50 // pred_check_branch
          %1046 = sbr.rel (%p1044) target = $region59
        $region58: #{encoder_forward.2} parent=50 // pred_region
          %vm1047 = vcmask 7168
          %1048 = vst.msk [vmem:[%s4] sm:$0xff] %vm1047, 0.0
          %1049 = vst.msk [vmem:[%s4 + $0x8] sm:$0xff] %vm1047, 0.0
          %1050 = vst.msk [vmem:[%s4 + $0x10] sm:$0xff] %vm1047, 0.0
          %1051 = vst.msk [vmem:[%s4 + $0x18] sm:$0xff] %vm1047, 0.0
          %1052 = vst.msk [vmem:[%s5] sm:$0xff] %vm1047, 0.0
          %1053 = vst.msk [vmem:[%s5 + $0x8] sm:$0xff] %vm1047, 0.0
          %1054 = vst.msk [vmem:[%s5 + $0x10] sm:$0xff] %vm1047, 0.0
          %1055 = vst.msk [vmem:[%s5 + $0x18] sm:$0xff] %vm1047, 0.0
        $region59: #{encoder_forward.2} parent=50 // pred_fallthru
          _
        %v1056 = vld [vmem:[%s4] sm:$0xff]
        %v1057 = vld [vmem:[%s4 + $0x8] sm:$0xff]
        %v1058 = vld [vmem:[%s4 + $0x10] sm:$0xff]
        %v1059 = vld [vmem:[%s4 + $0x18] sm:$0xff]
        %v1060 = vadd.f32 %v1027, %v1028
        %v1061 = vadd.f32 %v1060, %v1029
        %v1062 = vadd.f32 %v1061, %v1030
        %1063 = vadd.xlane.f32.xlu0 %v1062
        %v1064 = vpop.xlane.xlu0 %1063
        %v1065 = vadd.f32 %v1031, %v1032
        %v1066 = vadd.f32 %v1065, %v1033
        %v1067 = vadd.f32 %v1066, %v1034
        %1068 = vadd.xlane.f32.xlu0 %v1067
        %v1069 = vpop.xlane.xlu0 %1068
        %v1070 = vadd.f32 %v1035, %v1036
        %v1071 = vadd.f32 %v1070, %v1037
        %v1072 = vadd.f32 %v1071, %v1038
        %1073 = vadd.xlane.f32.xlu0 %v1072
        %v1074 = vpop.xlane.xlu0 %1073
        %v1075 = vadd.f32 %v1039, %v1040
        %v1076 = vadd.f32 %v1075, %v1041
        %v1077 = vadd.f32 %v1076, %v1042
        %1078 = vadd.xlane.f32.xlu0 %v1077
        %v1079 = vpop.xlane.xlu0 %1078
        %v1080 = vadd.f32 %v1056, %v1064
        %v1081 = vadd.f32 %v1057, %v1069
        %v1082 = vadd.f32 %v1058, %v1074
        %v1083 = vadd.f32 %v1059, %v1079
        %vm1084 = vcmask 7168
        %1085 = vst.msk [vmem:[%s4] sm:$0xff] %vm1084, %v1080
        %1086 = vst.msk [vmem:[%s4 + $0x8] sm:$0xff] %vm1084, %v1081
        %1087 = vst.msk [vmem:[%s4 + $0x10] sm:$0xff] %vm1084, %v1082
        %1088 = vst.msk [vmem:[%s4 + $0x18] sm:$0xff] %vm1084, %v1083
        %v1089 = vld [vmem:[%s5] sm:$0xff]
        %v1090 = vld [vmem:[%s5 + $0x8] sm:$0xff]
        %v1091 = vld [vmem:[%s5 + $0x10] sm:$0xff]
        %v1092 = vld [vmem:[%s5 + $0x18] sm:$0xff]
        %v1093 = vmul.f32 %v1027, %v1027
        %v1094 = vmul.f32 %v1028, %v1028
        %v1095 = vmul.f32 %v1029, %v1029
        %v1096 = vmul.f32 %v1030, %v1030
        %v1097 = vmul.f32 %v1031, %v1031
        %v1098 = vmul.f32 %v1032, %v1032
        %v1099 = vmul.f32 %v1033, %v1033
        %v1100 = vmul.f32 %v1034, %v1034
        %v1101 = vmul.f32 %v1035, %v1035
        %v1102 = vmul.f32 %v1036, %v1036
        %v1103 = vmul.f32 %v1037, %v1037
        %v1104 = vmul.f32 %v1038, %v1038
        %v1105 = vmul.f32 %v1039, %v1039
        %v1106 = vmul.f32 %v1040, %v1040
        %v1107 = vmul.f32 %v1041, %v1041
        %v1108 = vmul.f32 %v1042, %v1042
        %v1109 = vadd.f32 %v1093, %v1094
        %v1110 = vadd.f32 %v1109, %v1095
        %v1111 = vadd.f32 %v1110, %v1096
        %1112 = vadd.xlane.f32.xlu0 %v1111
        %v1113 = vpop.xlane.xlu0 %1112
        %v1114 = vadd.f32 %v1097, %v1098
        %v1115 = vadd.f32 %v1114, %v1099
        %v1116 = vadd.f32 %v1115, %v1100
        %1117 = vadd.xlane.f32.xlu0 %v1116
        %v1118 = vpop.xlane.xlu0 %1117
        %v1119 = vadd.f32 %v1101, %v1102
        %v1120 = vadd.f32 %v1119, %v1103
        %v1121 = vadd.f32 %v1120, %v1104
        %1122 = vadd.xlane.f32.xlu0 %v1121
        %v1123 = vpop.xlane.xlu0 %1122
        %v1124 = vadd.f32 %v1105, %v1106
        %v1125 = vadd.f32 %v1124, %v1107
        %v1126 = vadd.f32 %v1125, %v1108
        %1127 = vadd.xlane.f32.xlu0 %v1126
        %v1128 = vpop.xlane.xlu0 %1127
        %v1129 = vadd.f32 %v1089, %v1113
        %v1130 = vadd.f32 %v1090, %v1118
        %v1131 = vadd.f32 %v1091, %v1123
        %v1132 = vadd.f32 %v1092, %v1128
        %1133 = vst.msk [vmem:[%s5] sm:$0xff] %vm1084, %v1129
        %1134 = vst.msk [vmem:[%s5 + $0x8] sm:$0xff] %vm1084, %v1130
        %1135 = vst.msk [vmem:[%s5 + $0x10] sm:$0xff] %vm1084, %v1131
        %1136 = vst.msk [vmem:[%s5 + $0x18] sm:$0xff] %vm1084, %v1132
        %s1137 = sand.u32 %s93, 1
        %s1138 = sand.u32 %s93, 1
        %s1139 = smul.addr %s1138, 64
        %s1140 = scalar_lea.vmem [#allocation3], %s1139
        // Predicated region
        $region60: #{encoder_forward.2} parent=50 // pred_check
          %p1141 = pneg %p103
        $region61: #{encoder_forward.2} parent=50 // pred_check_branch
          %1143 = sbr.rel (%p1141) target = $region63
        $region62: #{encoder_forward.2} parent=50 // pred_region
          %s1144 = smul.u32 4, %s17
          %s1145 = smul.addr %s1144, 4
          %s1146 = scalar_lea.vmem %s3, %s1145
          // Predicated region
          $region64: #{encoder_forward.2} parent=62 // pred_check
            _
          $region65: #{encoder_forward.2} parent=62 // pred_check_branch
            %1148 = sbr.rel (0) target = $region67
          $region66: #{encoder_forward.2} parent=62 // pred_region
            // Predicated region
            $region68: #{encoder_forward.2} parent=66 // pred_check
              _
            $region69: #{encoder_forward.2} parent=66 // pred_check_branch
              %1150 = sbr.rel (0) target = $region71
            $region70: #{encoder_forward.2} parent=66 // pred_region
              loop: start=0, step=1, limit=1
              $region72: #{encoder_forward.2} parent=70 // loop_pre_header
                _
              $region73: #{encoder_forward.2} parent=70 // loop_header
                %s1152 = sphi 0, %s1156
                %p1153 = scmp.ge.s32.totalorder %s1152, 1
                %s1157 = sphi %s1140, %s1140
                %s1158 = sphi %s1146, %s1146
              $region74: #{encoder_forward.2} parent=70 // loop_header_branch
                %1155 = sbr.rel (%p1153) target = $region78
              $region75: #{encoder_forward.2} parent=70 // loop_body
                %v1159 = vld [vmem:[%s1157] sm:$0xff]
                %1160 = vst [vmem:[%s1158] sm:$0xff] %v1159
                %v1161 = vld [vmem:[%s1157 + $0x8] sm:$0xff]
                %1162 = vst [vmem:[%s1158 + $0x8] sm:$0xff] %v1161
                %v1163 = vld [vmem:[%s1157 + $0x10] sm:$0xff]
                %1164 = vst [vmem:[%s1158 + $0x20] sm:$0xff] %v1163
                %v1165 = vld [vmem:[%s1157 + $0x18] sm:$0xff]
                %1166 = vst [vmem:[%s1158 + $0x28] sm:$0xff] %v1165
                %v1167 = vld [vmem:[%s1157 + $0x20] sm:$0xff]
                %1168 = vst [vmem:[%s1158 + $0x40] sm:$0xff] %v1167
                %v1169 = vld [vmem:[%s1157 + $0x28] sm:$0xff]
                %1170 = vst [vmem:[%s1158 + $0x48] sm:$0xff] %v1169
                %v1171 = vld [vmem:[%s1157 + $0x30] sm:$0xff]
                %1172 = vst [vmem:[%s1158 + $0x60] sm:$0xff] %v1171
                %v1173 = vld [vmem:[%s1157 + $0x38] sm:$0xff]
                %1174 = vst [vmem:[%s1158 + $0x68] sm:$0xff] %v1173
              $region76: #{encoder_forward.2} parent=70 // loop_footer
                %s1156 = sadd.s32 1, %s1152
              $region77: #{encoder_forward.2} parent=70 // loop_footer_branch
                %1151 = sbr.rel target = $region73
              $region78: #{encoder_forward.2} parent=70 // loop_exit
                _
            $region71: #{encoder_forward.2} parent=66 // pred_fallthru
              _
            // Predicated region
            $region79: #{encoder_forward.2} parent=66 // pred_check
              _
            $region80: #{encoder_forward.2} parent=66 // pred_check_branch
              %1176 = sbr.rel target = $region82
            $region81: #{encoder_forward.2} parent=66 // pred_region
              _
            $region82: #{encoder_forward.2} parent=66 // pred_fallthru
              _
          $region67: #{encoder_forward.2} parent=62 // pred_fallthru
            _
          %1177 = vnop
        $region63: #{encoder_forward.2} parent=50 // pred_fallthru
          _
        // Predicated region
        $region83: #{encoder_forward.2} parent=50 // pred_check
          %p1178 = pneg %p124
        $region84: #{encoder_forward.2} parent=50 // pred_check_branch
          %1180 = sbr.rel (%p1178) target = $region86
        $region85: #{encoder_forward.2} parent=50 // pred_region
          _
        $region86: #{encoder_forward.2} parent=50 // pred_fallthru
          _
        // Predicated region
        $region87: #{encoder_forward.2} parent=50 // pred_check
          %p1181 = pneg %p145
        $region88: #{encoder_forward.2} parent=50 // pred_check_branch
          %1183 = sbr.rel (%p1181) target = $region90
        $region89: #{encoder_forward.2} parent=50 // pred_region
          _
        $region90: #{encoder_forward.2} parent=50 // pred_fallthru
          _
        // Predicated region
        $region91: #{encoder_forward.2} parent=50 // pred_check
          %p1184 = pneg %p124
        $region92: #{encoder_forward.2} parent=50 // pred_check_branch
          %1186 = sbr.rel (%p1184) target = $region94
        $region93: #{encoder_forward.2} parent=50 // pred_region
          _
        $region94: #{encoder_forward.2} parent=50 // pred_fallthru
          _
        // Predicated region
        $region95: #{encoder_forward.2} parent=50 // pred_check
          %p1187 = pneg %p145
        $region96: #{encoder_forward.2} parent=50 // pred_check_branch
          %1189 = sbr.rel (%p1187) target = $region98
        $region97: #{encoder_forward.2} parent=50 // pred_region
          _
        $region98: #{encoder_forward.2} parent=50 // pred_fallthru
          _
      $region51: #{encoder_forward.2} parent=5 // pred_fallthru
        _
      %p1190 = scmp.le.s32.totalorder 2, %s12
      // Predicated region
      $region99: #{encoder_forward.2} parent=5 // pred_check
        %p1191 = pneg %p1190
      $region100: #{encoder_forward.2} parent=5 // pred_check_branch
        %1193 = sbr.rel (%p1191) target = $region102
      $region101: #{encoder_forward.2} parent=5 // pred_region
        %s1194 = ssub.s32 %s12, 2
        // Predicated region
        $region103: #{encoder_forward.2} parent=101 // pred_check
          %p1195 = pneg %p109
        $region104: #{encoder_forward.2} parent=101 // pred_check_branch
          %1197 = sbr.rel (%p1195) target = $region106
        $region105: #{encoder_forward.2} parent=101 // pred_region
          %s1198 = sand.u32 %s94, 1
          %s1199 = sand.u32 %s94, 1
          %s1200 = smul.addr %s1199, 64
          %s1201 = scalar_lea.vmem [#allocation3], %s1200
        $region106: #{encoder_forward.2} parent=101 // pred_fallthru
          _
      $region102: #{encoder_forward.2} parent=5 // pred_fallthru
        _
    $region6: #{encoder_forward.2} parent=1 // loop_footer
      %s16 = sadd.s32 1, %s12
    $region7: #{encoder_forward.2} parent=1 // loop_footer_branch
      %11 = sbr.rel target = $region3
    $region8: #{encoder_forward.2} parent=1 // loop_exit
      _

// kernel: encoder_forward.3
$region0: #{encoder_forward.3}
  #allocation0 [shape = 'u32[]', space=smem, size = 0x4, offset = 0x4, fixed_abs, tag = 'smem constant byte address 0x4 - core index']
  #allocation1 [shape = 'u32[144,128]{1,0:T(1,128)}', space=vmem, size = 0x12000, scoped, tag = 'internal scratch']
  #allocation2 [shape = 'f32[1,1]{1,0:T(1,128)S(1)}', space=vmem, size = 0x200, scoped, tag = 'scoped memory for encoder_forward.3']
  %s0 = inlined_call_operand.vmem [shape: bf16[896,128], index: 0, kind: input, shape index: {}]
  %s1 = inlined_call_operand.vmem [shape: bf16[32,896], index: 1, kind: input, shape index: {}]
  %s2 = inlined_call_operand.vmem [shape: f32[32,1], index: 2, kind: input, shape index: {}]
  %s3 = inlined_call_operand.vmem [shape: f32[32,1], index: 3, kind: input, shape index: {}]
  %s4 = inlined_call_operand.<no memory space> [shape: f32[1,1], index: 4, kind: input, shape index: {}]
  %s5 = inlined_call_operand.vmem [shape: f32[1,128], index: 5, kind: output, shape index: {}]
  %s6 = sld [smem:[#allocation0]]
  $region30: #{encoder_forward.3} parent=0
    _
  %s8 = ssub.s32 1, %s6
  %s9 = scalar_select 0, %s8, %s6
  %v10 = vstv %s4
  %11 = vst [vmem:[#allocation2] sm:$0x1] %v10
  // Predicated region
  $region2: #{encoder_forward.3} parent=0 // pred_check
    _
  $region3: #{encoder_forward.3} parent=0 // pred_check_branch
    %13 = sbr.rel (0) target = $region5
  $region4: #{encoder_forward.3} parent=0 // pred_region
    _
  $region5: #{encoder_forward.3} parent=0 // pred_fallthru
    _
  // Predicated region
  $region6: #{encoder_forward.3} parent=0 // pred_check
    _
  $region7: #{encoder_forward.3} parent=0 // pred_check_branch
    %15 = sbr.rel (0) target = $region9
  $region8: #{encoder_forward.3} parent=0 // pred_region
    _
  $region9: #{encoder_forward.3} parent=0 // pred_fallthru
    _
  // Predicated region
  $region10: #{encoder_forward.3} parent=0 // pred_check
    _
  $region11: #{encoder_forward.3} parent=0 // pred_check_branch
    %17 = sbr.rel (0) target = $region13
  $region12: #{encoder_forward.3} parent=0 // pred_region
    _
  $region13: #{encoder_forward.3} parent=0 // pred_fallthru
    _
  // Predicated region
  $region14: #{encoder_forward.3} parent=0 // pred_check
    _
  $region15: #{encoder_forward.3} parent=0 // pred_check_branch
    %19 = sbr.rel (0) target = $region17
  $region16: #{encoder_forward.3} parent=0 // pred_region
    _
  $region17: #{encoder_forward.3} parent=0 // pred_fallthru
    _
  // Predicated region
  $region18: #{encoder_forward.3} parent=0 // pred_check
    _
  $region19: #{encoder_forward.3} parent=0 // pred_check_branch
    %21 = sbr.rel (0) target = $region21
  $region20: #{encoder_forward.3} parent=0 // pred_region
    _
  $region21: #{encoder_forward.3} parent=0 // pred_fallthru
    _
  %v23 = vld [vmem:[%s1] sm:$0xff]
  %v24 = vld [vmem:[%s1 + $0x8] sm:$0xff]
  %v25 = vld [vmem:[%s1 + $0x10] sm:$0xff]
  %v26 = vld [vmem:[%s1 + $0x18] sm:$0xf]
  %v27 = vld [vmem:[%s1 + $0x1c] sm:$0xff]
  %v28 = vld [vmem:[%s1 + $0x24] sm:$0xff]
  %v29 = vld [vmem:[%s1 + $0x2c] sm:$0xff]
  %v30 = vld [vmem:[%s1 + $0x34] sm:$0xf]
  %v31 = vld [vmem:[%s1 + $0x38] sm:$0xff]
  %v32 = vld [vmem:[%s1 + $0x40] sm:$0xff]
  %v33 = vld [vmem:[%s1 + $0x48] sm:$0xff]
  %v34 = vld [vmem:[%s1 + $0x50] sm:$0xf]
  %v35 = vld [vmem:[%s1 + $0x54] sm:$0xff]
  %v36 = vld [vmem:[%s1 + $0x5c] sm:$0xff]
  %v37 = vld [vmem:[%s1 + $0x64] sm:$0xff]
  %v38 = vld [vmem:[%s1 + $0x6c] sm:$0xf]
  %v39 = vld [vmem:[%s0] sm:$0xf]
  %v40 = vld [vmem:[%s0 + $0x4] sm:$0xf]
  %v41 = vld [vmem:[%s0 + $0x8] sm:$0xf]
  %v42 = vld [vmem:[%s0 + $0xc] sm:$0xf]
  %v43 = vld [vmem:[%s0 + $0x10] sm:$0xf]
  %v44 = vld [vmem:[%s0 + $0x14] sm:$0xf]
  %v45 = vld [vmem:[%s0 + $0x18] sm:$0xf]
  %v46 = vld [vmem:[%s0 + $0x1c] sm:$0xf]
  %v47 = vld [vmem:[%s0 + $0x20] sm:$0xf]
  %v48 = vld [vmem:[%s0 + $0x24] sm:$0xf]
  %v49 = vld [vmem:[%s0 + $0x28] sm:$0xf]
  %v50 = vld [vmem:[%s0 + $0x2c] sm:$0xf]
  %v51 = vld [vmem:[%s0 + $0x30] sm:$0xf]
  %v52 = vld [vmem:[%s0 + $0x34] sm:$0xf]
  %v53 = vld [vmem:[%s0 + $0x38] sm:$0xf]
  %v54 = vld [vmem:[%s0 + $0x3c] sm:$0xf]
  %v55 = vld [vmem:[%s0 + $0x40] sm:$0xf]
  %v56 = vld [vmem:[%s0 + $0x44] sm:$0xf]
  %v57 = vld [vmem:[%s0 + $0x48] sm:$0xf]
  %v58 = vld [vmem:[%s0 + $0x4c] sm:$0xf]
  %v59 = vld [vmem:[%s0 + $0x50] sm:$0xf]
  %v60 = vld [vmem:[%s0 + $0x54] sm:$0xf]
  %v61 = vld [vmem:[%s0 + $0x58] sm:$0xf]
  %v62 = vld [vmem:[%s0 + $0x5c] sm:$0xf]
  %v63 = vld [vmem:[%s0 + $0x60] sm:$0xf]
  %v64 = vld [vmem:[%s0 + $0x64] sm:$0xf]
  %v65 = vld [vmem:[%s0 + $0x68] sm:$0xf]
  %v66 = vld [vmem:[%s0 + $0x6c] sm:$0xf]
  %v67 = vld [vmem:[%s0 + $0x70] sm:$0xf]
  %v68 = vld [vmem:[%s0 + $0x74] sm:$0xf]
  %v69 = vld [vmem:[%s0 + $0x78] sm:$0xf]
  %v70 = vld [vmem:[%s0 + $0x7c] sm:$0xf]
  %v71 = vld [vmem:[%s0 + $0x80] sm:$0xf]
  %v72 = vld [vmem:[%s0 + $0x84] sm:$0xf]
  %v73 = vld [vmem:[%s0 + $0x88] sm:$0xf]
  %v74 = vld [vmem:[%s0 + $0x8c] sm:$0xf]
  %v75 = vld [vmem:[%s0 + $0x90] sm:$0xf]
  %v76 = vld [vmem:[%s0 + $0x94] sm:$0xf]
  %v77 = vld [vmem:[%s0 + $0x98] sm:$0xf]
  %v78 = vld [vmem:[%s0 + $0x9c] sm:$0xf]
  %v79 = vld [vmem:[%s0 + $0xa0] sm:$0xf]
  %v80 = vld [vmem:[%s0 + $0xa4] sm:$0xf]
  %v81 = vld [vmem:[%s0 + $0xa8] sm:$0xf]
  %v82 = vld [vmem:[%s0 + $0xac] sm:$0xf]
  %v83 = vld [vmem:[%s0 + $0xb0] sm:$0xf]
  %v84 = vld [vmem:[%s0 + $0xb4] sm:$0xf]
  %v85 = vld [vmem:[%s0 + $0xb8] sm:$0xf]
  %v86 = vld [vmem:[%s0 + $0xbc] sm:$0xf]
  %v87 = vld [vmem:[%s0 + $0xc0] sm:$0xf]
  %v88 = vld [vmem:[%s0 + $0xc4] sm:$0xf]
  %v89 = vld [vmem:[%s0 + $0xc8] sm:$0xf]
  %v90 = vld [vmem:[%s0 + $0xcc] sm:$0xf]
  %v91 = vld [vmem:[%s0 + $0xd0] sm:$0xf]
  %v92 = vld [vmem:[%s0 + $0xd4] sm:$0xf]
  %v93 = vld [vmem:[%s0 + $0xd8] sm:$0xf]
  %v94 = vld [vmem:[%s0 + $0xdc] sm:$0xf]
  %v95 = vld [vmem:[%s0 + $0xe0] sm:$0xf]
  %v96 = vld [vmem:[%s0 + $0xe4] sm:$0xf]
  %v97 = vld [vmem:[%s0 + $0xe8] sm:$0xf]
  %v98 = vld [vmem:[%s0 + $0xec] sm:$0xf]
  %v99 = vld [vmem:[%s0 + $0xf0] sm:$0xf]
  %v100 = vld [vmem:[%s0 + $0xf4] sm:$0xf]
  %v101 = vld [vmem:[%s0 + $0xf8] sm:$0xf]
  %v102 = vld [vmem:[%s0 + $0xfc] sm:$0xf]
  %v103 = vld [vmem:[%s0 + $0x100] sm:$0xf]
  %v104 = vld [vmem:[%s0 + $0x104] sm:$0xf]
  %v105 = vld [vmem:[%s0 + $0x108] sm:$0xf]
  %v106 = vld [vmem:[%s0 + $0x10c] sm:$0xf]
  %v107 = vld [vmem:[%s0 + $0x110] sm:$0xf]
  %v108 = vld [vmem:[%s0 + $0x114] sm:$0xf]
  %v109 = vld [vmem:[%s0 + $0x118] sm:$0xf]
  %v110 = vld [vmem:[%s0 + $0x11c] sm:$0xf]
  %v111 = vld [vmem:[%s0 + $0x120] sm:$0xf]
  %v112 = vld [vmem:[%s0 + $0x124] sm:$0xf]
  %v113 = vld [vmem:[%s0 + $0x128] sm:$0xf]
  %v114 = vld [vmem:[%s0 + $0x12c] sm:$0xf]
  %v115 = vld [vmem:[%s0 + $0x130] sm:$0xf]
  %v116 = vld [vmem:[%s0 + $0x134] sm:$0xf]
  %v117 = vld [vmem:[%s0 + $0x138] sm:$0xf]
  %v118 = vld [vmem:[%s0 + $0x13c] sm:$0xf]
  %v119 = vld [vmem:[%s0 + $0x140] sm:$0xf]
  %v120 = vld [vmem:[%s0 + $0x144] sm:$0xf]
  %v121 = vld [vmem:[%s0 + $0x148] sm:$0xf]
  %v122 = vld [vmem:[%s0 + $0x14c] sm:$0xf]
  %v123 = vld [vmem:[%s0 + $0x150] sm:$0xf]
  %v124 = vld [vmem:[%s0 + $0x154] sm:$0xf]
  %v125 = vld [vmem:[%s0 + $0x158] sm:$0xf]
  %v126 = vld [vmem:[%s0 + $0x15c] sm:$0xf]
  %v127 = vld [vmem:[%s0 + $0x160] sm:$0xf]
  %v128 = vld [vmem:[%s0 + $0x164] sm:$0xf]
  %v129 = vld [vmem:[%s0 + $0x168] sm:$0xf]
  %v130 = vld [vmem:[%s0 + $0x16c] sm:$0xf]
  %v131 = vld [vmem:[%s0 + $0x170] sm:$0xf]
  %v132 = vld [vmem:[%s0 + $0x174] sm:$0xf]
  %v133 = vld [vmem:[%s0 + $0x178] sm:$0xf]
  %v134 = vld [vmem:[%s0 + $0x17c] sm:$0xf]
  %v135 = vld [vmem:[%s0 + $0x180] sm:$0xf]
  %v136 = vld [vmem:[%s0 + $0x184] sm:$0xf]
  %v137 = vld [vmem:[%s0 + $0x188] sm:$0xf]
  %v138 = vld [vmem:[%s0 + $0x18c] sm:$0xf]
  %v139 = vld [vmem:[%s0 + $0x190] sm:$0xf]
  %v140 = vld [vmem:[%s0 + $0x194] sm:$0xf]
  %v141 = vld [vmem:[%s0 + $0x198] sm:$0xf]
  %v142 = vld [vmem:[%s0 + $0x19c] sm:$0xf]
  %v143 = vld [vmem:[%s0 + $0x1a0] sm:$0xf]
  %v144 = vld [vmem:[%s0 + $0x1a4] sm:$0xf]
  %v145 = vld [vmem:[%s0 + $0x1a8] sm:$0xf]
  %v146 = vld [vmem:[%s0 + $0x1ac] sm:$0xf]
  %v147 = vld [vmem:[%s0 + $0x1b0] sm:$0xf]
  %v148 = vld [vmem:[%s0 + $0x1b4] sm:$0xf]
  %v149 = vld [vmem:[%s0 + $0x1b8] sm:$0xf]
  %v150 = vld [vmem:[%s0 + $0x1bc] sm:$0xf]
  %v151 = vld [vmem:[%s2] sm:$0xff]
  %v152 = vld [vmem:[%s2 + $0x8] sm:$0xff]
  %v153 = vld [vmem:[%s2 + $0x10] sm:$0xff]
  %v154 = vld [vmem:[%s2 + $0x18] sm:$0xff]
  %156 = vset.pattern.permute.xlu0 0
  %157 = vperm.xlu0 %156, %v151
  %v158 = vpop.permute.xlu0 %157
  %161 = vset.pattern.permute.xlu0 0
  %162 = vperm.xlu0 %161, %v152
  %v163 = vpop.permute.xlu0 %162
  %166 = vset.pattern.permute.xlu0 0
  %167 = vperm.xlu0 %166, %v153
  %v168 = vpop.permute.xlu0 %167
  %171 = vset.pattern.permute.xlu0 0
  %172 = vperm.xlu0 %171, %v154
  %v173 = vpop.permute.xlu0 %172
  %v191 = vunpack.c.l.b16 %v23
  %v192 = vunpack.c.h.b16 %v23
  %v193 = vunpack.c.l.b16 %v24
  %v194 = vunpack.c.h.b16 %v24
  %v195 = vunpack.c.l.b16 %v25
  %v196 = vunpack.c.h.b16 %v25
  %v197 = vunpack.c.l.b16 %v26
  %v198 = vunpack.c.l.b16 %v27
  %v199 = vunpack.c.h.b16 %v27
  %v200 = vunpack.c.l.b16 %v28
  %v201 = vunpack.c.h.b16 %v28
  %v202 = vunpack.c.l.b16 %v29
  %v203 = vunpack.c.h.b16 %v29
  %v204 = vunpack.c.l.b16 %v30
  %v205 = vunpack.c.l.b16 %v31
  %v206 = vunpack.c.h.b16 %v31
  %v207 = vunpack.c.l.b16 %v32
  %v208 = vunpack.c.h.b16 %v32
  %v209 = vunpack.c.l.b16 %v33
  %v210 = vunpack.c.h.b16 %v33
  %v211 = vunpack.c.l.b16 %v34
  %v212 = vunpack.c.l.b16 %v35
  %v213 = vunpack.c.h.b16 %v35
  %v214 = vunpack.c.l.b16 %v36
  %v215 = vunpack.c.h.b16 %v36
  %v216 = vunpack.c.l.b16 %v37
  %v217 = vunpack.c.h.b16 %v37
  %v218 = vunpack.c.l.b16 %v38
  %v219 = vpack.c.b16 %v198, %v191
  %v220 = vpack.c.b16 %v199, %v192
  %v221 = vpack.c.b16 %v200, %v193
  %v222 = vpack.c.b16 %v201, %v194
  %v223 = vpack.c.b16 %v202, %v195
  %v224 = vpack.c.b16 %v203, %v196
  %v225 = vpack.c.b16 %v204, %v197
  %v226 = vpack.c.b16 %v212, %v205
  %v227 = vpack.c.b16 %v213, %v206
  %v228 = vpack.c.b16 %v214, %v207
  %v229 = vpack.c.b16 %v215, %v208
  %v230 = vpack.c.b16 %v216, %v209
  %v231 = vpack.c.b16 %v217, %v210
  %v232 = vpack.c.b16 %v218, %v211
  %v359 = vunpack.c.l.b16 %v39
  %v360 = vunpack.c.l.b16 %v40
  %v361 = vunpack.c.l.b16 %v41
  %v362 = vunpack.c.l.b16 %v42
  %v363 = vunpack.c.l.b16 %v43
  %v364 = vunpack.c.l.b16 %v44
  %v365 = vunpack.c.l.b16 %v45
  %v366 = vunpack.c.l.b16 %v46
  %v367 = vunpack.c.l.b16 %v47
  %v368 = vunpack.c.l.b16 %v48
  %v369 = vunpack.c.l.b16 %v49
  %v370 = vunpack.c.l.b16 %v50
  %v371 = vunpack.c.l.b16 %v51
  %v372 = vunpack.c.l.b16 %v52
  %v373 = vunpack.c.l.b16 %v53
  %v374 = vunpack.c.l.b16 %v54
  %v375 = vunpack.c.l.b16 %v55
  %v376 = vunpack.c.l.b16 %v56
  %v377 = vunpack.c.l.b16 %v57
  %v378 = vunpack.c.l.b16 %v58
  %v379 = vunpack.c.l.b16 %v59
  %v380 = vunpack.c.l.b16 %v60
  %v381 = vunpack.c.l.b16 %v61
  %v382 = vunpack.c.l.b16 %v62
  %v383 = vunpack.c.l.b16 %v63
  %v384 = vunpack.c.l.b16 %v64
  %v385 = vunpack.c.l.b16 %v65
  %v386 = vunpack.c.l.b16 %v66
  %v387 = vunpack.c.l.b16 %v67
  %v388 = vunpack.c.l.b16 %v68
  %v389 = vunpack.c.l.b16 %v69
  %v390 = vunpack.c.l.b16 %v70
  %v391 = vunpack.c.l.b16 %v71
  %v392 = vunpack.c.l.b16 %v72
  %v393 = vunpack.c.l.b16 %v73
  %v394 = vunpack.c.l.b16 %v74
  %v395 = vunpack.c.l.b16 %v75
  %v396 = vunpack.c.l.b16 %v76
  %v397 = vunpack.c.l.b16 %v77
  %v398 = vunpack.c.l.b16 %v78
  %v399 = vunpack.c.l.b16 %v79
  %v400 = vunpack.c.l.b16 %v80
  %v401 = vunpack.c.l.b16 %v81
  %v402 = vunpack.c.l.b16 %v82
  %v403 = vunpack.c.l.b16 %v83
  %v404 = vunpack.c.l.b16 %v84
  %v405 = vunpack.c.l.b16 %v85
  %v406 = vunpack.c.l.b16 %v86
  %v407 = vunpack.c.l.b16 %v87
  %v408 = vunpack.c.l.b16 %v88
  %v409 = vunpack.c.l.b16 %v89
  %v410 = vunpack.c.l.b16 %v90
  %v411 = vunpack.c.l.b16 %v91
  %v412 = vunpack.c.l.b16 %v92
  %v413 = vunpack.c.l.b16 %v93
  %v414 = vunpack.c.l.b16 %v94
  %v415 = vunpack.c.l.b16 %v95
  %v416 = vunpack.c.l.b16 %v96
  %v417 = vunpack.c.l.b16 %v97
  %v418 = vunpack.c.l.b16 %v98
  %v419 = vunpack.c.l.b16 %v99
  %v420 = vunpack.c.l.b16 %v100
  %v421 = vunpack.c.l.b16 %v101
  %v422 = vunpack.c.l.b16 %v102
  %v423 = vunpack.c.l.b16 %v103
  %v424 = vunpack.c.l.b16 %v104
  %v425 = vunpack.c.l.b16 %v105
  %v426 = vunpack.c.l.b16 %v106
  %v427 = vunpack.c.l.b16 %v107
  %v428 = vunpack.c.l.b16 %v108
  %v429 = vunpack.c.l.b16 %v109
  %v430 = vunpack.c.l.b16 %v110
  %v431 = vunpack.c.l.b16 %v111
  %v432 = vunpack.c.l.b16 %v112
  %v433 = vunpack.c.l.b16 %v113
  %v434 = vunpack.c.l.b16 %v114
  %v435 = vunpack.c.l.b16 %v115
  %v436 = vunpack.c.l.b16 %v116
  %v437 = vunpack.c.l.b16 %v117
  %v438 = vunpack.c.l.b16 %v118
  %v439 = vunpack.c.l.b16 %v119
  %v440 = vunpack.c.l.b16 %v120
  %v441 = vunpack.c.l.b16 %v121
  %v442 = vunpack.c.l.b16 %v122
  %v443 = vunpack.c.l.b16 %v123
  %v444 = vunpack.c.l.b16 %v124
  %v445 = vunpack.c.l.b16 %v125
  %v446 = vunpack.c.l.b16 %v126
  %v447 = vunpack.c.l.b16 %v127
  %v448 = vunpack.c.l.b16 %v128
  %v449 = vunpack.c.l.b16 %v129
  %v450 = vunpack.c.l.b16 %v130
  %v451 = vunpack.c.l.b16 %v131
  %v452 = vunpack.c.l.b16 %v132
  %v453 = vunpack.c.l.b16 %v133
  %v454 = vunpack.c.l.b16 %v134
  %v455 = vunpack.c.l.b16 %v135
  %v456 = vunpack.c.l.b16 %v136
  %v457 = vunpack.c.l.b16 %v137
  %v458 = vunpack.c.l.b16 %v138
  %v459 = vunpack.c.l.b16 %v139
  %v460 = vunpack.c.l.b16 %v140
  %v461 = vunpack.c.l.b16 %v141
  %v462 = vunpack.c.l.b16 %v142
  %v463 = vunpack.c.l.b16 %v143
  %v464 = vunpack.c.l.b16 %v144
  %v465 = vunpack.c.l.b16 %v145
  %v466 = vunpack.c.l.b16 %v146
  %v467 = vunpack.c.l.b16 %v147
  %v468 = vunpack.c.l.b16 %v148
  %v469 = vunpack.c.l.b16 %v149
  %v470 = vunpack.c.l.b16 %v150
  %v471 = vpack.c.b16 %v360, %v359
  %v472 = vpack.c.b16 %v362, %v361
  %v473 = vpack.c.b16 %v364, %v363
  %v474 = vpack.c.b16 %v366, %v365
  %v475 = vpack.c.b16 %v368, %v367
  %v476 = vpack.c.b16 %v370, %v369
  %v477 = vpack.c.b16 %v372, %v371
  %v478 = vpack.c.b16 %v374, %v373
  %v479 = vpack.c.b16 %v376, %v375
  %v480 = vpack.c.b16 %v378, %v377
  %v481 = vpack.c.b16 %v380, %v379
  %v482 = vpack.c.b16 %v382, %v381
  %v483 = vpack.c.b16 %v384, %v383
  %v484 = vpack.c.b16 %v386, %v385
  %v485 = vpack.c.b16 %v388, %v387
  %v486 = vpack.c.b16 %v390, %v389
  %v487 = vpack.c.b16 %v392, %v391
  %v488 = vpack.c.b16 %v394, %v393
  %v489 = vpack.c.b16 %v396, %v395
  %v490 = vpack.c.b16 %v398, %v397
  %v491 = vpack.c.b16 %v400, %v399
  %v492 = vpack.c.b16 %v402, %v401
  %v493 = vpack.c.b16 %v404, %v403
  %v494 = vpack.c.b16 %v406, %v405
  %v495 = vpack.c.b16 %v408, %v407
  %v496 = vpack.c.b16 %v410, %v409
  %v497 = vpack.c.b16 %v412, %v411
  %v498 = vpack.c.b16 %v414, %v413
  %v499 = vpack.c.b16 %v416, %v415
  %v500 = vpack.c.b16 %v418, %v417
  %v501 = vpack.c.b16 %v420, %v419
  %v502 = vpack.c.b16 %v422, %v421
  %v503 = vpack.c.b16 %v424, %v423
  %v504 = vpack.c.b16 %v426, %v425
  %v505 = vpack.c.b16 %v428, %v427
  %v506 = vpack.c.b16 %v430, %v429
  %v507 = vpack.c.b16 %v432, %v431
  %v508 = vpack.c.b16 %v434, %v433
  %v509 = vpack.c.b16 %v436, %v435
  %v510 = vpack.c.b16 %v438, %v437
  %v511 = vpack.c.b16 %v440, %v439
  %v512 = vpack.c.b16 %v442, %v441
  %v513 = vpack.c.b16 %v444, %v443
  %v514 = vpack.c.b16 %v446, %v445
  %v515 = vpack.c.b16 %v448, %v447
  %v516 = vpack.c.b16 %v450, %v449
  %v517 = vpack.c.b16 %v452, %v451
  %v518 = vpack.c.b16 %v454, %v453
  %v519 = vpack.c.b16 %v456, %v455
  %v520 = vpack.c.b16 %v458, %v457
  %v521 = vpack.c.b16 %v460, %v459
  %v522 = vpack.c.b16 %v462, %v461
  %v523 = vpack.c.b16 %v464, %v463
  %v524 = vpack.c.b16 %v466, %v465
  %v525 = vpack.c.b16 %v468, %v467
  %v526 = vpack.c.b16 %v470, %v469
  %583 = vmatprep.subr.bf16.mxu0 0
  %584 = vmatpush1.bf16.msra.mxu0 %v478
  %585 = vmatprep.subr.bf16.mxu0 0
  %586 = vmatpush1.bf16.msra.mxu0 %v477
  %587 = vmatprep.subr.bf16.mxu0 0
  %588 = vmatpush1.bf16.msra.mxu0 %v476
  %589 = vmatprep.subr.bf16.mxu0 0
  %590 = vmatpush1.bf16.msra.mxu0 %v475
  %591 = vmatprep.subr.bf16.mxu0 0
  %592 = vmatpush1.bf16.msra.mxu0 %v474
  %593 = vmatprep.subr.bf16.mxu0 0
  %594 = vmatpush1.bf16.msra.mxu0 %v473
  %595 = vmatprep.subr.bf16.mxu0 0
  %596 = vmatpush1.bf16.msra.mxu0 %v472
  %597 = vmatprep.subr.bf16.mxu0 0
  %598 = vmatpush1.bf16.msra.mxu0 %v471
  %599 = vmatprep.subr.bf16.mxu0 0
  %600 = vmatpush2.bf16.msra.mxu0 %v486
  %601 = vmatprep.subr.bf16.mxu0 0
  %602 = vmatpush2.bf16.msra.mxu0 %v485
  %603 = vmatprep.subr.bf16.mxu0 0
  %604 = vmatpush2.bf16.msra.mxu0 %v484
  %605 = vmatprep.subr.bf16.mxu0 0
  %606 = vmatpush2.bf16.msra.mxu0 %v483
  %607 = vmatprep.subr.bf16.mxu0 0
  %608 = vmatpush2.bf16.msra.mxu0 %v482
  %609 = vmatprep.subr.bf16.mxu0 0
  %610 = vmatpush2.bf16.msra.mxu0 %v481
  %611 = vmatprep.subr.bf16.mxu0 0
  %612 = vmatpush2.bf16.msra.mxu0 %v480
  %613 = vmatprep.subr.bf16.mxu0 0
  %614 = vmatpush2.bf16.msra.mxu0 %v479
  %615 = vmatprep.mubr.bf16.mxu0 %v220
  %616 = vmatmul.mubr.bf16.gmra.mxu0 %v219
  %v617 = vpop.f32.mrf.mxu0
  %v618 = vadd.f32 %v158, %v617
  %v619 = vpop.f32.mrf.mxu0
  %v620 = vpop.f32.mrf.mxu0
  %v621 = vadd.f32 %v163, %v620
  %v622 = vpop.f32.mrf.mxu0
  %623 = vmatprep.mubr.bf16.mxu0 %v227
  %624 = vmatmul.mubr.bf16.gmra.mxu0 %v226
  %v625 = vpop.f32.mrf.mxu0
  %v626 = vadd.f32 %v168, %v625
  %v627 = vpop.f32.mrf.mxu0
  %v628 = vpop.f32.mrf.mxu0
  %v629 = vadd.f32 %v173, %v628
  %v630 = vpop.f32.mrf.mxu0
  %631 = vdwg.mxu0
  %632 = vmatprep.subr.bf16.mxu0 0
  %633 = vmatpush1.bf16.msra.mxu0 %v494
  %634 = vmatprep.subr.bf16.mxu0 0
  %635 = vmatpush1.bf16.msra.mxu0 %v493
  %636 = vmatprep.subr.bf16.mxu0 0
  %637 = vmatpush1.bf16.msra.mxu0 %v492
  %638 = vmatprep.subr.bf16.mxu0 0
  %639 = vmatpush1.bf16.msra.mxu0 %v491
  %640 = vmatprep.subr.bf16.mxu0 0
  %641 = vmatpush1.bf16.msra.mxu0 %v490
  %642 = vmatprep.subr.bf16.mxu0 0
  %643 = vmatpush1.bf16.msra.mxu0 %v489
  %644 = vmatprep.subr.bf16.mxu0 0
  %645 = vmatpush1.bf16.msra.mxu0 %v488
  %646 = vmatprep.subr.bf16.mxu0 0
  %647 = vmatpush1.bf16.msra.mxu0 %v487
  %648 = vmatprep.subr.bf16.mxu0 0
  %649 = vmatpush2.bf16.msra.mxu0 %v502
  %650 = vmatprep.subr.bf16.mxu0 0
  %651 = vmatpush2.bf16.msra.mxu0 %v501
  %652 = vmatprep.subr.bf16.mxu0 0
  %653 = vmatpush2.bf16.msra.mxu0 %v500
  %654 = vmatprep.subr.bf16.mxu0 0
  %655 = vmatpush2.bf16.msra.mxu0 %v499
  %656 = vmatprep.subr.bf16.mxu0 0
  %657 = vmatpush2.bf16.msra.mxu0 %v498
  %658 = vmatprep.subr.bf16.mxu0 0
  %659 = vmatpush2.bf16.msra.mxu0 %v497
  %660 = vmatprep.subr.bf16.mxu0 0
  %661 = vmatpush2.bf16.msra.mxu0 %v496
  %662 = vmatprep.subr.bf16.mxu0 0
  %663 = vmatpush2.bf16.msra.mxu0 %v495
  %664 = vmatprep.mubr.bf16.mxu0 %v222
  %665 = vmatmul.mubr.bf16.gmra.mxu0 %v221
  %v666 = vpop.f32.mrf.mxu0
  %v667 = vadd.f32 %v618, %v666
  %v668 = vpop.f32.mrf.mxu0
  %v669 = vpop.f32.mrf.mxu0
  %v670 = vadd.f32 %v621, %v669
  %v671 = vpop.f32.mrf.mxu0
  %672 = vmatprep.mubr.bf16.mxu0 %v229
  %673 = vmatmul.mubr.bf16.gmra.mxu0 %v228
  %v674 = vpop.f32.mrf.mxu0
  %v675 = vadd.f32 %v626, %v674
  %v676 = vpop.f32.mrf.mxu0
  %v677 = vpop.f32.mrf.mxu0
  %v678 = vadd.f32 %v629, %v677
  %v679 = vpop.f32.mrf.mxu0
  %680 = vdwg.mxu0
  %681 = vmatprep.subr.bf16.mxu0 0
  %682 = vmatpush1.bf16.msra.mxu0 %v510
  %683 = vmatprep.subr.bf16.mxu0 0
  %684 = vmatpush1.bf16.msra.mxu0 %v509
  %685 = vmatprep.subr.bf16.mxu0 0
  %686 = vmatpush1.bf16.msra.mxu0 %v508
  %687 = vmatprep.subr.bf16.mxu0 0
  %688 = vmatpush1.bf16.msra.mxu0 %v507
  %689 = vmatprep.subr.bf16.mxu0 0
  %690 = vmatpush1.bf16.msra.mxu0 %v506
  %691 = vmatprep.subr.bf16.mxu0 0
  %692 = vmatpush1.bf16.msra.mxu0 %v505
  %693 = vmatprep.subr.bf16.mxu0 0
  %694 = vmatpush1.bf16.msra.mxu0 %v504
  %695 = vmatprep.subr.bf16.mxu0 0
  %696 = vmatpush1.bf16.msra.mxu0 %v503
  %697 = vmatprep.subr.bf16.mxu0 0
  %698 = vmatpush2.bf16.msra.mxu0 %v518
  %699 = vmatprep.subr.bf16.mxu0 0
  %700 = vmatpush2.bf16.msra.mxu0 %v517
  %701 = vmatprep.subr.bf16.mxu0 0
  %702 = vmatpush2.bf16.msra.mxu0 %v516
  %703 = vmatprep.subr.bf16.mxu0 0
  %704 = vmatpush2.bf16.msra.mxu0 %v515
  %705 = vmatprep.subr.bf16.mxu0 0
  %706 = vmatpush2.bf16.msra.mxu0 %v514
  %707 = vmatprep.subr.bf16.mxu0 0
  %708 = vmatpush2.bf16.msra.mxu0 %v513
  %709 = vmatprep.subr.bf16.mxu0 0
  %710 = vmatpush2.bf16.msra.mxu0 %v512
  %711 = vmatprep.subr.bf16.mxu0 0
  %712 = vmatpush2.bf16.msra.mxu0 %v511
  %713 = vmatprep.mubr.bf16.mxu0 %v224
  %714 = vmatmul.mubr.bf16.gmra.mxu0 %v223
  %v715 = vpop.f32.mrf.mxu0
  %v716 = vadd.f32 %v667, %v715
  %v717 = vpop.f32.mrf.mxu0
  %v718 = vpop.f32.mrf.mxu0
  %v719 = vadd.f32 %v670, %v718
  %v720 = vpop.f32.mrf.mxu0
  %721 = vmatprep.mubr.bf16.mxu0 %v231
  %722 = vmatmul.mubr.bf16.gmra.mxu0 %v230
  %v723 = vpop.f32.mrf.mxu0
  %v724 = vadd.f32 %v675, %v723
  %v725 = vpop.f32.mrf.mxu0
  %v726 = vpop.f32.mrf.mxu0
  %v727 = vadd.f32 %v678, %v726
  %v728 = vpop.f32.mrf.mxu0
  %729 = vdwg.mxu0
  %730 = vmatprep.subr.bf16.mxu0 0
  %731 = vmatpush1.bf16.msra.mxu0 %v526
  %732 = vmatprep.subr.bf16.mxu0 0
  %733 = vmatpush1.bf16.msra.mxu0 %v525
  %734 = vmatprep.subr.bf16.mxu0 0
  %735 = vmatpush1.bf16.msra.mxu0 %v524
  %736 = vmatprep.subr.bf16.mxu0 0
  %737 = vmatpush1.bf16.msra.mxu0 %v523
  %738 = vmatprep.subr.bf16.mxu0 0
  %739 = vmatpush1.bf16.msra.mxu0 %v522
  %740 = vmatprep.subr.bf16.mxu0 0
  %741 = vmatpush1.bf16.msra.mxu0 %v521
  %742 = vmatprep.subr.bf16.mxu0 0
  %743 = vmatpush1.bf16.msra.mxu0 %v520
  %744 = vmatprep.subr.bf16.mxu0 0
  %745 = vmatpush1.bf16.msra.mxu0 %v519
  %746 = vmatprep.subr.bf16.mxu0 0
  %747 = vmatpush2.bf16.msra.mxu0 0
  %748 = vmatprep.subr.bf16.mxu0 0
  %749 = vmatpush2.bf16.msra.mxu0 0
  %750 = vmatprep.subr.bf16.mxu0 0
  %751 = vmatpush2.bf16.msra.mxu0 0
  %752 = vmatprep.subr.bf16.mxu0 0
  %753 = vmatpush2.bf16.msra.mxu0 0
  %754 = vmatprep.subr.bf16.mxu0 0
  %755 = vmatpush2.bf16.msra.mxu0 0
  %756 = vmatprep.subr.bf16.mxu0 0
  %757 = vmatpush2.bf16.msra.mxu0 0
  %758 = vmatprep.subr.bf16.mxu0 0
  %759 = vmatpush2.bf16.msra.mxu0 0
  %760 = vmatprep.subr.bf16.mxu0 0
  %761 = vmatpush2.bf16.msra.mxu0 0
  %762 = vmatprep.mubr.bf16.mxu0 0
  %763 = vmatmul.mubr.bf16.gmra.mxu0 %v225
  %v764 = vpop.f32.mrf.mxu0
  %v765 = vadd.f32 %v716, %v764
  %v766 = vpop.f32.mrf.mxu0
  %v767 = vpop.f32.mrf.mxu0
  %v768 = vadd.f32 %v719, %v767
  %v769 = vpop.f32.mrf.mxu0
  %770 = vmatprep.mubr.bf16.mxu0 0
  %771 = vmatmul.mubr.bf16.gmra.mxu0 %v232
  %v772 = vpop.f32.mrf.mxu0
  %v773 = vadd.f32 %v724, %v772
  %v774 = vpop.f32.mrf.mxu0
  %v775 = vpop.f32.mrf.mxu0
  %v776 = vadd.f32 %v727, %v775
  %v777 = vpop.f32.mrf.mxu0
  %778 = vdwg.mxu0
  %vm779 = vcmp.gt.f32.partialorder %v765, 0.0
  %vm780 = vcmp.gt.f32.partialorder %v768, 0.0
  %vm781 = vcmp.gt.f32.partialorder %v773, 0.0
  %vm782 = vcmp.gt.f32.partialorder %v776, 0.0
  %v783 = vmul.f32 %v765, 0.01
  %v784 = vmul.f32 %v768, 0.01
  %v785 = vmul.f32 %v773, 0.01
  %v786 = vmul.f32 %v776, 0.01
  %v787 = vsel %vm779, %v765, %v783
  %v788 = vsel %vm780, %v768, %v784
  %v789 = vsel %vm781, %v773, %v785
  %v790 = vsel %vm782, %v776, %v786
  %v791 = vld [vmem:[%s3] sm:$0xff]
  %v792 = vld [vmem:[%s3 + $0x8] sm:$0xff]
  %v793 = vld [vmem:[%s3 + $0x10] sm:$0xff]
  %v794 = vld [vmem:[%s3 + $0x18] sm:$0xff]
  %796 = vset.pattern.permute.xlu0 0
  %797 = vperm.xlu0 %796, %v791
  %v798 = vpop.permute.xlu0 %797
  %801 = vset.pattern.permute.xlu0 0
  %802 = vperm.xlu0 %801, %v792
  %v803 = vpop.permute.xlu0 %802
  %806 = vset.pattern.permute.xlu0 0
  %807 = vperm.xlu0 %806, %v793
  %v808 = vpop.permute.xlu0 %807
  %811 = vset.pattern.permute.xlu0 0
  %812 = vperm.xlu0 %811, %v794
  %v813 = vpop.permute.xlu0 %812
  %v815 = vmul.f32 %v787, %v798
  %v816 = vmul.f32 %v788, %v803
  %v817 = vmul.f32 %v789, %v808
  %v818 = vmul.f32 %v790, %v813
  %v819 = vadd.f32 %v815, %v816
  %v820 = vadd.f32 %v819, %v817
  %v821 = vadd.f32 %v820, %v818
  %v822 = vrot.slane %v821, 4
  %v823 = vadd.f32 %v821, %v822
  %v824 = vrot.slane %v823, 2
  %v825 = vadd.f32 %v823, %v824
  %v826 = vrot.slane %v825, 1
  %v827 = vadd.f32 %v825, %v826
  %v828 = vld [vmem:[#allocation2] sm:$0x1]
  %830 = vset.pattern.permute.xlu0 0
  %831 = vperm.xlu0 %830, %v828
  %v832 = vpop.permute.xlu0 %831
  %v834 = vlaneseq
  %v835 = vshrl.u32 %v834, 7
  %v836 = vsub.s32 0, %v835
  %v837 = vrot.slane %v832, %v836
  %v838 = vadd.f32 %v827, %v837
  %v839 = vtanh.pop %v838
  %840 = vst [vmem:[%s5] sm:$0x1] %v839
  // Predicated region
  $region22: #{encoder_forward.3} parent=0 // pred_check
    _
  $region23: #{encoder_forward.3} parent=0 // pred_check_branch
    %842 = sbr.rel (0) target = $region25
  $region24: #{encoder_forward.3} parent=0 // pred_region
    _
  $region25: #{encoder_forward.3} parent=0 // pred_fallthru
    _
  // Predicated region
  $region26: #{encoder_forward.3} parent=0 // pred_check
    _
  $region27: #{encoder_forward.3} parent=0 // pred_check_branch
    %844 = sbr.rel (0) target = $region29
  $region28: #{encoder_forward.3} parent=0 // pred_region
    _
  $region29: #{encoder_forward.3} parent=0 // pred_fallthru
    _

</llo_original>
